<compile_context>
chip_gen: v6e
topology: v6e:2x2x1
jax: 0.10.0
libtpu: 0.0.40
codegen_flags: <defaults>
</compile_context>

<pallas_src>
import jax
import jax.numpy as jnp
from jax.experimental import pallas as pl
from jax.experimental.pallas import tpu as pltpu

# ---- PW92 correlation parameters (constants baked into the kernel) ----
PARAMS_A_A      = (0.031091, 0.015545, 0.016887)
PARAMS_A_ALPHA1 = (0.2137,   0.20548,  0.11125)
PARAMS_A_BETA1  = (7.5957,   14.1189,  10.357)
PARAMS_A_BETA2  = (3.5876,   6.1977,   3.6231)
PARAMS_A_BETA3  = (1.6382,   3.3662,   0.88026)
PARAMS_A_BETA4  = (0.49294,  0.62517,  0.49671)
PARAMS_A_FZ20   = 1.709921
PARAMS_A_PP     = (1, 1, 1)

FOUR_THIRDS   = 4.0 / 3.0
INV_FZ20      = 1.0 / PARAMS_A_FZ20                  # constant reciprocal
INV_FZ_DENOM  = 1.0 / (2.0 ** FOUR_THIRDS - 2.0)     # constant reciprocal

# 2*a_k folded into the betas so g_aux is computed directly as 2a*g_aux.
TWO_A       = tuple(2.0 * a for a in PARAMS_A_A)
TWO_A_BETA1 = tuple(2.0 * a * b for a, b in zip(PARAMS_A_A, PARAMS_A_BETA1))
TWO_A_BETA2 = tuple(2.0 * a * b for a, b in zip(PARAMS_A_A, PARAMS_A_BETA2))
TWO_A_BETA3 = tuple(2.0 * a * b for a, b in zip(PARAMS_A_A, PARAMS_A_BETA3))
TWO_A_BETA4 = tuple(2.0 * a * b for a, b in zip(PARAMS_A_A, PARAMS_A_BETA4))

# bits(1.0f) * 4/3 : seed constant for the reciprocal-cube-root bit hack.
_INV_CBRT_MAGIC = (4.0 / 3.0) * float(0x3F800000)     # ~1.4204710e9
_ONE_THIRD = 1.0 / 3.0


def _pow_4_3(y):
    """y ** (4/3) for y >= 0 with no EUP pow/exp/log.

    z ~= y^(-1/3) from a float-domain bit-hack seed, refined by 4 division-free
    Newton steps  z <- z*(4 - y*z^3)/3  (quadratic convergence -> f32 exact).
    Result is (y*z)^2 = y^(4/3).  The Newton input is clamped away from 0 so
    the seed/iterations never overflow; multiplying by the unclamped y makes
    the y == 0 (zeta == +/-1) case return exactly 0 instead of NaN.
    """
    y_safe = jnp.maximum(y, 1e-12)
    bits_f = pltpu.bitcast(y_safe, jnp.int32).astype(jnp.float32)
    seed_i = (_INV_CBRT_MAGIC - bits_f * _ONE_THIRD).astype(jnp.int32)
    z = pltpu.bitcast(seed_i, jnp.float32)             # ~ y^(-1/3), few % error
    for _ in range(4):                                  # VPU-only refinement
        z = z * (4.0 - y_safe * (z * z * z)) * _ONE_THIRD
    t = y * z                                           # y^(2/3); 0 when y == 0
    return t * t                                        # y^(4/3)


def _g_shared(k, rs, sqrt_rs, rs15, rs2):
    """g(k, rs) with rs powers precomputed/shared and 2a pre-folded.

    2a*g_aux = 2a*(b1*sqrt(rs) + b2*rs + b3*rs^1.5 + b4*rs^2)   (pp == 1)
    g        = -2a*(1 + alpha1*rs) * log1p(1 / (2a*g_aux))
    """
    two_a_gaux = (TWO_A_BETA1[k] * sqrt_rs
                  + TWO_A_BETA2[k] * rs
                  + TWO_A_BETA3[k] * rs15
                  + TWO_A_BETA4[k] * rs2)
    # Exact reciprocal required: approx=True (~2^-12 rel err) propagates ~1:1
    # through log1p for the observed argument range and breaks rtol=1e-5.
    inv = pl.reciprocal(two_a_gaux, approx=False)
    return -TWO_A[k] * (1.0 + PARAMS_A_ALPHA1[k] * rs) * jnp.log1p(inv)


def pw_c_kernel(rs_ref, zeta_ref, out_ref):
    rs = rs_ref[...]
    zeta = zeta_ref[...]

    # Shared rs powers: 1 sqrt + 2 muls (instead of 3 sqrt + 3 pow).
    sqrt_rs = jnp.sqrt(rs)
    rs15 = rs * sqrt_rs
    rs2 = rs * rs

    g0 = _g_shared(0, rs, sqrt_rs, rs15, rs2)
    g1 = _g_shared(1, rs, sqrt_rs, rs15, rs2)
    g2 = _g_shared(2, rs, sqrt_rs, rs15, rs2)

    # f_zeta(zeta) = ((1+z)^(4/3) + (1-z)^(4/3) - 2) * 1/(2^(4/3) - 2)
    fz = (_pow_4_3(1.0 + zeta) + _pow_4_3(1.0 - zeta) - 2.0) * INV_FZ_DENOM

    # zeta^4 via two muls; constant reciprocal of fz20.
    z2 = zeta * zeta
    z4 = z2 * z2
    g2_scaled = g2 * INV_FZ20

    out_ref[...] = g0 + z4 * fz * (g1 - g0 + g2_scaled) - fz * g2_scaled


def _pick_block_rows(N, L, target_bytes=1 << 20, min_steps=16):
    """Row-block size: ~target_bytes per f32 buffer, >= min_steps grid steps
    when N allows, a multiple of 8 (f32 sublane), and a divisor of N."""
    if N % 8 != 0:
        return N                                   # full dim is always legal
    budget_rows = max(8, (target_bytes // (4 * L)) // 8 * 8)
    steps_rows = max(8, (N // min_steps) // 8 * 8)
    br = min(int(budget_rows), int(steps_rows), N)
    br = max(8, (br // 8) * 8)
    while br > 8 and N % br != 0:
        br -= 8
    if N % br != 0:
        br = N
    return int(br)


def pw_c(rs, zeta, *, block_rows=None):
    """Elementwise PW correlation energy density.

    rs, zeta: (N, L) float32 with L % 128 == 0.
    """
    assert rs.shape == zeta.shape and rs.ndim == 2
    N, L = rs.shape
    assert L % 128 == 0, "pad the lane (last) axis to a multiple of 128"

    if block_rows is None:
        block_rows = _pick_block_rows(N, L)
    else:
        assert block_rows == N or (block_rows % 8 == 0 and N % block_rows == 0), \
            "block_rows must be a multiple of 8 that divides N (or equal N)"

    grid = (N // block_rows,)
    spec = pl.BlockSpec((block_rows, L), lambda i: (i, 0))

    # 2 inputs + 1 output, double-buffered => 6 live buffers; leave headroom.
    block_bytes = block_rows * L * 4
    vmem_limit = int(min(64 << 20, max(16 << 20, 12 * block_bytes)))

    n_elem = N * L
    cost = pl.CostEstimate(
        flops=110 * n_elem,           # VPU adds/muls incl. Newton cube roots
        transcendentals=7 * n_elem,   # 1 sqrt + 3 exact recip + 3 log1p
        bytes_accessed=12 * n_elem,   # 2 f32 in + 1 f32 out
    )

    return pl.pallas_call(
        pw_c_kernel,
        out_shape=jax.ShapeDtypeStruct((N, L), jnp.float32),
        grid_spec=pl.GridSpec(
            grid=grid,
            in_specs=[spec, spec],
            out_specs=spec,
        ),
        compiler_params=pltpu.CompilerParams(
            dimension_semantics=("parallel",),
            vmem_limit_bytes=vmem_limit,
        ),
        cost_estimate=cost,
    )(rs, zeta)


def pw_c_reference(rs, zeta):
    """Pure-JAX reference mirroring the PyTorch forward exactly."""
    def g_aux(k, rs):
        return (PARAMS_A_BETA1[k] * jnp.sqrt(rs) + PARAMS_A_BETA2[k] * rs
                + PARAMS_A_BETA3[k] * rs ** 1.5
                + PARAMS_A_BETA4[k] * rs ** (PARAMS_A_PP[k] + 1))

    def g(k, rs):
        return -2.0 * PARAMS_A_A[k] * (1.0 + PARAMS_A_ALPHA1[k] * rs) * jnp.log(
            1.0 + 1.0 / (2.0 * PARAMS_A_A[k] * g_aux(k, rs)))

    fz = ((1.0 + zeta) ** FOUR_THIRDS + (1.0 - zeta) ** FOUR_THIRDS - 2.0) \
         / (2.0 ** FOUR_THIRDS - 2.0)
    return (g(0, rs)
            + zeta ** 4 * fz * (g(1, rs) - g(0, rs) + g(2, rs) / PARAMS_A_FZ20)
            - fz * g(2, rs) / PARAMS_A_FZ20)


if __name__ == "__main__":
    key = jax.random.PRNGKey(0)
    k_rs, k_z = jax.random.split(key)

    # Small, physically sensible inputs: rs > 0, zeta in (-1, 1).
    # N=1024 rows x 128 lanes; the block picker chooses 64-row blocks ->
    # 16 grid steps (>= 8 per TensorCore on v7x, even grid length).
    N, L = 1024, 128
    rs = jax.random.uniform(k_rs, (N, L), dtype=jnp.float32,
                            minval=0.1, maxval=10.0)
    zeta = jax.random.uniform(k_z, (N, L), dtype=jnp.float32,
                              minval=-0.95, maxval=0.95)

    out = pw_c(rs, zeta)
    out = jax.block_until_ready(out)

    ref = pw_c_reference(rs, zeta)
    assert out.shape == ref.shape and out.dtype == jnp.float32
    assert jnp.allclose(out, ref, rtol=1e-5, atol=1e-6), "mismatch vs reference"

    print("KERNEL_OK")
</pallas_src>

<mosaic_0001>
module attributes {stable_mosaic.version = 11 : i64} {
  func.func @pw_c_kernel(%arg0: i32, %arg1: memref<64x128xf32, #tpu.memory_space<vmem>>, %arg2: memref<64x128xf32, #tpu.memory_space<vmem>>, %arg3: memref<64x128xf32, #tpu.memory_space<vmem>>) attributes {dimension_semantics = [#tpu.dimension_semantics<parallel>], iteration_bounds = array<i64: 16>, scalar_prefetch = 0 : i64, scratch_operands = 0 : i64, tpu.core_type = #tpu.core_type<tc>, window_params = [{transform_indices = @transform_0, window_bounds = array<i64: 64, 128>}, {transform_indices = @transform_1, window_bounds = array<i64: 64, 128>}, {transform_indices = @transform_2, window_bounds = array<i64: 64, 128>}]} {
    %c0 = arith.constant 0 : index
    %c0_0 = arith.constant 0 : index
    %0 = vector.load %arg1[%c0, %c0_0] : memref<64x128xf32, #tpu.memory_space<vmem>>, vector<64x128xf32>
    %c0_1 = arith.constant 0 : index
    %c0_2 = arith.constant 0 : index
    %1 = vector.load %arg2[%c0_1, %c0_2] : memref<64x128xf32, #tpu.memory_space<vmem>>, vector<64x128xf32>
    %2 = math.sqrt %0 : vector<64x128xf32>
    %3 = arith.mulf %0, %2 : vector<64x128xf32>
    %4 = arith.mulf %0, %0 : vector<64x128xf32>
    %cst = arith.constant 0.472315818 : f32
    %5 = vector.broadcast %cst : f32 to vector<64x128xf32>
    %6 = arith.mulf %5, %2 : vector<64x128xf32>
    %cst_3 = arith.constant 0.223084137 : f32
    %7 = vector.broadcast %cst_3 : f32 to vector<64x128xf32>
    %8 = arith.mulf %7, %0 : vector<64x128xf32>
    %9 = arith.addf %6, %8 : vector<64x128xf32>
    %cst_4 = arith.constant 0.101866551 : f32
    %10 = vector.broadcast %cst_4 : f32 to vector<64x128xf32>
    %11 = arith.mulf %10, %3 : vector<64x128xf32>
    %12 = arith.addf %9, %11 : vector<64x128xf32>
    %cst_5 = arith.constant 0.0306519959 : f32
    %13 = vector.broadcast %cst_5 : f32 to vector<64x128xf32>
    %14 = arith.mulf %13, %4 : vector<64x128xf32>
    %15 = arith.addf %12, %14 : vector<64x128xf32>
    %16 = tpu.reciprocal %15 : vector<64x128xf32> -> vector<64x128xf32>
    %cst_6 = arith.constant 2.137000e-01 : f32
    %17 = vector.broadcast %cst_6 : f32 to vector<64x128xf32>
    %18 = arith.mulf %17, %0 : vector<64x128xf32>
    %cst_7 = arith.constant 1.000000e+00 : f32
    %19 = vector.broadcast %cst_7 : f32 to vector<64x128xf32>
    %20 = arith.addf %19, %18 : vector<64x128xf32>
    %cst_8 = arith.constant -6.218200e-02 : f32
    %21 = vector.broadcast %cst_8 : f32 to vector<64x128xf32>
    %22 = arith.mulf %21, %20 : vector<64x128xf32>
    %23 = math.log1p %16 : vector<64x128xf32>
    %24 = arith.mulf %22, %23 : vector<64x128xf32>
    %cst_9 = arith.constant 0.438956589 : f32
    %25 = vector.broadcast %cst_9 : f32 to vector<64x128xf32>
    %26 = arith.mulf %25, %2 : vector<64x128xf32>
    %cst_10 = arith.constant 0.192686498 : f32
    %27 = vector.broadcast %cst_10 : f32 to vector<64x128xf32>
    %28 = arith.mulf %27, %0 : vector<64x128xf32>
    %29 = arith.addf %26, %28 : vector<64x128xf32>
    %cst_11 = arith.constant 0.104655161 : f32
    %30 = vector.broadcast %cst_11 : f32 to vector<64x128xf32>
    %31 = arith.mulf %30, %3 : vector<64x128xf32>
    %32 = arith.addf %29, %31 : vector<64x128xf32>
    %cst_12 = arith.constant 0.0194365345 : f32
    %33 = vector.broadcast %cst_12 : f32 to vector<64x128xf32>
    %34 = arith.mulf %33, %4 : vector<64x128xf32>
    %35 = arith.addf %32, %34 : vector<64x128xf32>
    %36 = tpu.reciprocal %35 : vector<64x128xf32> -> vector<64x128xf32>
    %cst_13 = arith.constant 2.054800e-01 : f32
    %37 = vector.broadcast %cst_13 : f32 to vector<64x128xf32>
    %38 = arith.mulf %37, %0 : vector<64x128xf32>
    %cst_14 = arith.constant 1.000000e+00 : f32
    %39 = vector.broadcast %cst_14 : f32 to vector<64x128xf32>
    %40 = arith.addf %39, %38 : vector<64x128xf32>
    %cst_15 = arith.constant -3.109000e-02 : f32
    %41 = vector.broadcast %cst_15 : f32 to vector<64x128xf32>
    %42 = arith.mulf %41, %40 : vector<64x128xf32>
    %43 = math.log1p %36 : vector<64x128xf32>
    %44 = arith.mulf %42, %43 : vector<64x128xf32>
    %cst_16 = arith.constant 0.349797308 : f32
    %45 = vector.broadcast %cst_16 : f32 to vector<64x128xf32>
    %46 = arith.mulf %45, %2 : vector<64x128xf32>
    %cst_17 = arith.constant 0.122366577 : f32
    %47 = vector.broadcast %cst_17 : f32 to vector<64x128xf32>
    %48 = arith.mulf %47, %0 : vector<64x128xf32>
    %49 = arith.addf %46, %48 : vector<64x128xf32>
    %cst_18 = arith.constant 2.972990e-02 : f32
    %50 = vector.broadcast %cst_18 : f32 to vector<64x128xf32>
    %51 = arith.mulf %50, %3 : vector<64x128xf32>
    %52 = arith.addf %49, %51 : vector<64x128xf32>
    %cst_19 = arith.constant 0.0167758837 : f32
    %53 = vector.broadcast %cst_19 : f32 to vector<64x128xf32>
    %54 = arith.mulf %53, %4 : vector<64x128xf32>
    %55 = arith.addf %52, %54 : vector<64x128xf32>
    %56 = tpu.reciprocal %55 : vector<64x128xf32> -> vector<64x128xf32>
    %cst_20 = arith.constant 1.112500e-01 : f32
    %57 = vector.broadcast %cst_20 : f32 to vector<64x128xf32>
    %58 = arith.mulf %57, %0 : vector<64x128xf32>
    %cst_21 = arith.constant 1.000000e+00 : f32
    %59 = vector.broadcast %cst_21 : f32 to vector<64x128xf32>
    %60 = arith.addf %59, %58 : vector<64x128xf32>
    %cst_22 = arith.constant -3.377400e-02 : f32
    %61 = vector.broadcast %cst_22 : f32 to vector<64x128xf32>
    %62 = arith.mulf %61, %60 : vector<64x128xf32>
    %63 = math.log1p %56 : vector<64x128xf32>
    %64 = arith.mulf %62, %63 : vector<64x128xf32>
    %cst_23 = arith.constant 1.000000e+00 : f32
    %65 = vector.broadcast %cst_23 : f32 to vector<64x128xf32>
    %66 = arith.addf %65, %1 : vector<64x128xf32>
    %cst_24 = arith.constant 9.99999996E-13 : f32
    %67 = vector.broadcast %cst_24 : f32 to vector<64x128xf32>
    %68 = arith.maximumf %66, %67 : vector<64x128xf32>
    %69 = tpu.bitcast %68 : vector<64x128xf32> -> vector<64x128xi32>
    %70 = arith.sitofp %69 : vector<64x128xi32> to vector<64x128xf32>
    %cst_25 = arith.constant 0.333333343 : f32
    %71 = vector.broadcast %cst_25 : f32 to vector<64x128xf32>
    %72 = arith.mulf %70, %71 : vector<64x128xf32>
    %cst_26 = arith.constant 1.42047091E+9 : f32
    %73 = vector.broadcast %cst_26 : f32 to vector<64x128xf32>
    %74 = arith.subf %73, %72 : vector<64x128xf32>
    %75 = arith.fptosi %74 : vector<64x128xf32> to vector<64x128xi32>
    %76 = tpu.bitcast %75 : vector<64x128xi32> -> vector<64x128xf32>
    %77 = arith.mulf %76, %76 : vector<64x128xf32>
    %78 = arith.mulf %77, %76 : vector<64x128xf32>
    %79 = arith.mulf %68, %78 : vector<64x128xf32>
    %cst_27 = arith.constant 4.000000e+00 : f32
    %80 = vector.broadcast %cst_27 : f32 to vector<64x128xf32>
    %81 = arith.subf %80, %79 : vector<64x128xf32>
    %82 = arith.mulf %76, %81 : vector<64x128xf32>
    %cst_28 = arith.constant 0.333333343 : f32
    %83 = vector.broadcast %cst_28 : f32 to vector<64x128xf32>
    %84 = arith.mulf %82, %83 : vector<64x128xf32>
    %85 = arith.mulf %84, %84 : vector<64x128xf32>
    %86 = arith.mulf %85, %84 : vector<64x128xf32>
    %87 = arith.mulf %68, %86 : vector<64x128xf32>
    %cst_29 = arith.constant 4.000000e+00 : f32
    %88 = vector.broadcast %cst_29 : f32 to vector<64x128xf32>
    %89 = arith.subf %88, %87 : vector<64x128xf32>
    %90 = arith.mulf %84, %89 : vector<64x128xf32>
    %cst_30 = arith.constant 0.333333343 : f32
    %91 = vector.broadcast %cst_30 : f32 to vector<64x128xf32>
    %92 = arith.mulf %90, %91 : vector<64x128xf32>
    %93 = arith.mulf %92, %92 : vector<64x128xf32>
    %94 = arith.mulf %93, %92 : vector<64x128xf32>
    %95 = arith.mulf %68, %94 : vector<64x128xf32>
    %cst_31 = arith.constant 4.000000e+00 : f32
    %96 = vector.broadcast %cst_31 : f32 to vector<64x128xf32>
    %97 = arith.subf %96, %95 : vector<64x128xf32>
    %98 = arith.mulf %92, %97 : vector<64x128xf32>
    %cst_32 = arith.constant 0.333333343 : f32
    %99 = vector.broadcast %cst_32 : f32 to vector<64x128xf32>
    %100 = arith.mulf %98, %99 : vector<64x128xf32>
    %101 = arith.mulf %100, %100 : vector<64x128xf32>
    %102 = arith.mulf %101, %100 : vector<64x128xf32>
    %103 = arith.mulf %68, %102 : vector<64x128xf32>
    %cst_33 = arith.constant 4.000000e+00 : f32
    %104 = vector.broadcast %cst_33 : f32 to vector<64x128xf32>
    %105 = arith.subf %104, %103 : vector<64x128xf32>
    %106 = arith.mulf %100, %105 : vector<64x128xf32>
    %cst_34 = arith.constant 0.333333343 : f32
    %107 = vector.broadcast %cst_34 : f32 to vector<64x128xf32>
    %108 = arith.mulf %106, %107 : vector<64x128xf32>
    %109 = arith.mulf %66, %108 : vector<64x128xf32>
    %110 = arith.mulf %109, %109 : vector<64x128xf32>
    %cst_35 = arith.constant 1.000000e+00 : f32
    %111 = vector.broadcast %cst_35 : f32 to vector<64x128xf32>
    %112 = arith.subf %111, %1 : vector<64x128xf32>
    %cst_36 = arith.constant 9.99999996E-13 : f32
    %113 = vector.broadcast %cst_36 : f32 to vector<64x128xf32>
    %114 = arith.maximumf %112, %113 : vector<64x128xf32>
    %115 = tpu.bitcast %114 : vector<64x128xf32> -> vector<64x128xi32>
    %116 = arith.sitofp %115 : vector<64x128xi32> to vector<64x128xf32>
    %cst_37 = arith.constant 0.333333343 : f32
    %117 = vector.broadcast %cst_37 : f32 to vector<64x128xf32>
    %118 = arith.mulf %116, %117 : vector<64x128xf32>
    %cst_38 = arith.constant 1.42047091E+9 : f32
    %119 = vector.broadcast %cst_38 : f32 to vector<64x128xf32>
    %120 = arith.subf %119, %118 : vector<64x128xf32>
    %121 = arith.fptosi %120 : vector<64x128xf32> to vector<64x128xi32>
    %122 = tpu.bitcast %121 : vector<64x128xi32> -> vector<64x128xf32>
    %123 = arith.mulf %122, %122 : vector<64x128xf32>
    %124 = arith.mulf %123, %122 : vector<64x128xf32>
    %125 = arith.mulf %114, %124 : vector<64x128xf32>
    %cst_39 = arith.constant 4.000000e+00 : f32
    %126 = vector.broadcast %cst_39 : f32 to vector<64x128xf32>
    %127 = arith.subf %126, %125 : vector<64x128xf32>
    %128 = arith.mulf %122, %127 : vector<64x128xf32>
    %cst_40 = arith.constant 0.333333343 : f32
    %129 = vector.broadcast %cst_40 : f32 to vector<64x128xf32>
    %130 = arith.mulf %128, %129 : vector<64x128xf32>
    %131 = arith.mulf %130, %130 : vector<64x128xf32>
    %132 = arith.mulf %131, %130 : vector<64x128xf32>
    %133 = arith.mulf %114, %132 : vector<64x128xf32>
    %cst_41 = arith.constant 4.000000e+00 : f32
    %134 = vector.broadcast %cst_41 : f32 to vector<64x128xf32>
    %135 = arith.subf %134, %133 : vector<64x128xf32>
    %136 = arith.mulf %130, %135 : vector<64x128xf32>
    %cst_42 = arith.constant 0.333333343 : f32
    %137 = vector.broadcast %cst_42 : f32 to vector<64x128xf32>
    %138 = arith.mulf %136, %137 : vector<64x128xf32>
    %139 = arith.mulf %138, %138 : vector<64x128xf32>
    %140 = arith.mulf %139, %138 : vector<64x128xf32>
    %141 = arith.mulf %114, %140 : vector<64x128xf32>
    %cst_43 = arith.constant 4.000000e+00 : f32
    %142 = vector.broadcast %cst_43 : f32 to vector<64x128xf32>
    %143 = arith.subf %142, %141 : vector<64x128xf32>
    %144 = arith.mulf %138, %143 : vector<64x128xf32>
    %cst_44 = arith.constant 0.333333343 : f32
    %145 = vector.broadcast %cst_44 : f32 to vector<64x128xf32>
    %146 = arith.mulf %144, %145 : vector<64x128xf32>
    %147 = arith.mulf %146, %146 : vector<64x128xf32>
    %148 = arith.mulf %147, %146 : vector<64x128xf32>
    %149 = arith.mulf %114, %148 : vector<64x128xf32>
    %cst_45 = arith.constant 4.000000e+00 : f32
    %150 = vector.broadcast %cst_45 : f32 to vector<64x128xf32>
    %151 = arith.subf %150, %149 : vector<64x128xf32>
    %152 = arith.mulf %146, %151 : vector<64x128xf32>
    %cst_46 = arith.constant 0.333333343 : f32
    %153 = vector.broadcast %cst_46 : f32 to vector<64x128xf32>
    %154 = arith.mulf %152, %153 : vector<64x128xf32>
    %155 = arith.mulf %112, %154 : vector<64x128xf32>
    %156 = arith.mulf %155, %155 : vector<64x128xf32>
    %157 = arith.addf %110, %156 : vector<64x128xf32>
    %cst_47 = arith.constant 2.000000e+00 : f32
    %158 = vector.broadcast %cst_47 : f32 to vector<64x128xf32>
    %159 = arith.subf %157, %158 : vector<64x128xf32>
    %cst_48 = arith.constant 1.92366099 : f32
    %160 = vector.broadcast %cst_48 : f32 to vector<64x128xf32>
    %161 = arith.mulf %159, %160 : vector<64x128xf32>
    %162 = arith.mulf %1, %1 : vector<64x128xf32>
    %163 = arith.mulf %162, %162 : vector<64x128xf32>
    %cst_49 = arith.constant 0.584822357 : f32
    %164 = vector.broadcast %cst_49 : f32 to vector<64x128xf32>
    %165 = arith.mulf %64, %164 : vector<64x128xf32>
    %166 = arith.mulf %163, %161 : vector<64x128xf32>
    %167 = arith.subf %44, %24 : vector<64x128xf32>
    %168 = arith.addf %167, %165 : vector<64x128xf32>
    %169 = arith.mulf %166, %168 : vector<64x128xf32>
    %170 = arith.addf %24, %169 : vector<64x128xf32>
    %171 = arith.mulf %161, %165 : vector<64x128xf32>
    %172 = arith.subf %170, %171 : vector<64x128xf32>
    %c0_50 = arith.constant 0 : index
    %c0_51 = arith.constant 0 : index
    %173 = vector.load %arg3[%c0_50, %c0_51] : memref<64x128xf32, #tpu.memory_space<vmem>>, vector<64x128xf32>
    tpu.vector_store %arg3[%c0_50, %c0_51], %172 {strides = array<i32>} : memref<64x128xf32, #tpu.memory_space<vmem>>, vector<64x128xf32>,
    return
  }
  func.func @transform_0(%arg0: i32) -> (i32, i32) {
    %c0_i32 = arith.constant 0 : i32
    %c0_i32_0 = arith.constant 0 : i32
    return %arg0, %c0_i32 : i32, i32
  }
  func.func @transform_1(%arg0: i32) -> (i32, i32) {
    %c0_i32 = arith.constant 0 : i32
    %c0_i32_0 = arith.constant 0 : i32
    return %arg0, %c0_i32 : i32, i32
  }
  func.func @transform_2(%arg0: i32) -> (i32, i32) {
    %c0_i32 = arith.constant 0 : i32
    %c0_i32_0 = arith.constant 0 : i32
    return %arg0, %c0_i32 : i32, i32
  }
}

</mosaic_0001>

<llo_original>
// kernel: tpu_custom_call.1
$region0: #{tpu_custom_call.1}
  #allocation0 [shape = 'u32[]', space=smem, size = 0x4, offset = 0x4, fixed_abs, tag = 'smem constant byte address 0x4 - core index']
  #allocation1 [shape = 'u32[144,128]{1,0:T(1,128)}', space=vmem, size = 0x12000, scoped, tag = 'internal scratch']
  %s0 = inlined_call_operand.hbm [shape: f32[1024,128], index: 0, kind: input, shape index: {}]
  %s1 = inlined_call_operand.hbm [shape: f32[1024,128], index: 1, kind: input, shape index: {}]
  %s2 = inlined_call_operand.hbm [shape: f32[1024,128], index: 2, kind: output, shape index: {}]
  %s3 = sld [smem:[#allocation0]]
  $region49: #{tpu_custom_call.1} parent=0
    _
  %s5 = ssub.s32 1, %s3
  %s6 = scalar_select 0, %s5, %s3
  $region1: #{tpu_custom_call.1} parent=0
    #allocation2 [shape = 'u8[65536]{0}', space=vmem, size = 0x10000, scoped, tag = 'input window, operand 0']
    #allocation3 [shape = 's32[2]{0}', space=sflag, size = 0x8, scoped, tag = 'scoped memory for tpu_custom_call.1']
    #allocation4 [shape = 's32[2]{0}', space=sflag, size = 0x8, scoped, tag = 'scoped memory for tpu_custom_call.1']
    #allocation5 [shape = 'u8[65536]{0}', space=vmem, size = 0x10000, scoped, tag = 'input window, operand 1']
    #allocation6 [shape = 's32[2]{0}', space=sflag, size = 0x8, scoped, tag = 'scoped memory for tpu_custom_call.1']
    #allocation7 [shape = 'u8[65536]{0}', space=vmem, size = 0x10000, scoped, tag = 'output window, operand 0']
    %7 = vsyncpa [#allocation3], 0
    %s8 = scalar_lea.sflag [#allocation3], 1
    %9 = vsyncpa %s8, 0
    %10 = vsyncpa [#allocation6], 0
    %s11 = scalar_lea.sflag [#allocation6], 1
    %12 = vsyncpa %s11, 0
    %13 = vsyncpa [#allocation4], 0
    %s14 = scalar_lea.sflag [#allocation4], 1
    %15 = vsyncpa %s14, 0
    loop: start=0, step=1, limit=18
    $region2: #{tpu_custom_call.1} parent=1 // loop_pre_header
      _
    $region3: #{tpu_custom_call.1} parent=1 // loop_header
      %s17 = sphi 0, %s21
      %p18 = scmp.ge.s32.totalorder %s17, 18
      %s27 = sphi 0, %s29
      %s30 = sphi 0, %s27
      %s31 = sphi 0, %s30
      %s47 = sphi 0, %s31
      %s53 = sphi 0, %s55
      %s56 = sphi 0, %s53
      %s57 = sphi 0, %s56
      %s73 = sphi 0, %s57
      %s79 = sphi 0, %s81
      %s82 = sphi 0, %s79
      %s83 = sphi 0, %s82
      %s99 = sphi 0, %s83
    $region4: #{tpu_custom_call.1} parent=1 // loop_header_branch
      %20 = sbr.rel (%p18) target = $region8
    $region5: #{tpu_custom_call.1} parent=1 // loop_body
      %s22 = ssub.s32 %s17, 1
      %s23 = ssub.s32 %s17, 2
      %s24 = sadd.s32 %s17, 1
      %s25 = ssub.s32 %s17, %s24
      %p26 = scmp.eq.s32.totalorder %s25, 0
      %s28 = sadd.s32 %s27, 1
      %s29 = scalar_select %p26, %s27, %s28
      %p32 = pneg %p26
      %p33 = scmp.eq.s32.totalorder %s17, 15
      %p34 = por %p32, %p33
      %p35 = scmp.ne.s32.totalorder %s27, %s30
      %p36 = scmp.eq.s32.totalorder %s17, 0
      %p37 = por %p35, %p36
      %p38 = scmp.ne.s32.totalorder %s27, %s30
      %p39 = scmp.eq.s32.totalorder %s22, 15
      %p40 = por %p38, %p39
      %p41 = scmp.ne.s32.totalorder %s30, %s31
      %p42 = scmp.eq.s32.totalorder %s22, 0
      %p43 = por %p41, %p42
      %p44 = scmp.ne.s32.totalorder %s30, %s31
      %p45 = scmp.eq.s32.totalorder %s23, 15
      %p46 = por %p44, %p45
      %p48 = scmp.ne.s32.totalorder %s31, %s47
      %p49 = scmp.eq.s32.totalorder %s23, 0
      %p50 = por %p48, %p49
      %s51 = ssub.s32 %s17, %s24
      %p52 = scmp.eq.s32.totalorder %s51, 0
      %s54 = sadd.s32 %s53, 1
      %s55 = scalar_select %p52, %s53, %s54
      %p58 = pneg %p52
      %p59 = scmp.eq.s32.totalorder %s17, 15
      %p60 = por %p58, %p59
      %p61 = scmp.ne.s32.totalorder %s53, %s56
      %p62 = scmp.eq.s32.totalorder %s17, 0
      %p63 = por %p61, %p62
      %p64 = scmp.ne.s32.totalorder %s53, %s56
      %p65 = scmp.eq.s32.totalorder %s22, 15
      %p66 = por %p64, %p65
      %p67 = scmp.ne.s32.totalorder %s56, %s57
      %p68 = scmp.eq.s32.totalorder %s22, 0
      %p69 = por %p67, %p68
      %p70 = scmp.ne.s32.totalorder %s56, %s57
      %p71 = scmp.eq.s32.totalorder %s23, 15
      %p72 = por %p70, %p71
      %p74 = scmp.ne.s32.totalorder %s57, %s73
      %p75 = scmp.eq.s32.totalorder %s23, 0
      %p76 = por %p74, %p75
      %s77 = ssub.s32 %s17, %s24
      %p78 = scmp.eq.s32.totalorder %s77, 0
      %s80 = sadd.s32 %s79, 1
      %s81 = scalar_select %p78, %s79, %s80
      %p84 = pneg %p78
      %p85 = scmp.eq.s32.totalorder %s17, 15
      %p86 = por %p84, %p85
      %p87 = scmp.ne.s32.totalorder %s79, %s82
      %p88 = scmp.eq.s32.totalorder %s17, 0
      %p89 = por %p87, %p88
      %p90 = scmp.ne.s32.totalorder %s79, %s82
      %p91 = scmp.eq.s32.totalorder %s22, 15
      %p92 = por %p90, %p91
      %p93 = scmp.ne.s32.totalorder %s82, %s83
      %p94 = scmp.eq.s32.totalorder %s22, 0
      %p95 = por %p93, %p94
      %p96 = scmp.ne.s32.totalorder %s82, %s83
      %p97 = scmp.eq.s32.totalorder %s23, 15
      %p98 = por %p96, %p97
      %p100 = scmp.ne.s32.totalorder %s83, %s99
      %p101 = scmp.eq.s32.totalorder %s23, 0
      %p102 = por %p100, %p101
      %p103 = scmp.le.s32.totalorder 1, %s17
      %p104 = scmp.lt.s32.totalorder %s17, 17
      %p105 = pnand %p103, %p104
      %p106 = pneg %p105
      // Predicated region
      $region9: #{tpu_custom_call.1} parent=5 // pred_check
        _
      $region10: #{tpu_custom_call.1} parent=5 // pred_check_branch
        %108 = sbr.rel (%p105) target = $region12
      $region11: #{tpu_custom_call.1} parent=5 // pred_region
        %s109 = ssub.s32 %s17, 1
      $region12: #{tpu_custom_call.1} parent=5 // pred_fallthru
        _
      %p110 = scmp.lt.s32.totalorder %s17, 16
      // Predicated region
      $region13: #{tpu_custom_call.1} parent=5 // pred_check
        %p111 = pneg %p110
      $region14: #{tpu_custom_call.1} parent=5 // pred_check_branch
        %113 = sbr.rel (%p111) target = $region16
      $region15: #{tpu_custom_call.1} parent=5 // pred_region
        // Predicated region
        $region17: #{tpu_custom_call.1} parent=15 // pred_check
          %p114 = pneg %p37
        $region18: #{tpu_custom_call.1} parent=15 // pred_check_branch
          %116 = sbr.rel (%p114) target = $region20
        $region19: #{tpu_custom_call.1} parent=15 // pred_region
          %s117 = sand.u32 %s27, 1
          %s118 = scalar_lea.sflag [#allocation3], %s117
          %s119 = sand.u32 %s27, 1
          %s120 = smul.addr %s119, 64
          %s121 = scalar_lea.vmem [#allocation2], %s120
          %s122 = smul.u32 8, %s17
          %s124 = ssub.s32 1024, 1024
          %125 = vsyncadd %s118, %s124
          %s126 = smul.addr %s122, 128
          %s127 = scalar_lea.hbm %s0, %s126
          %s128 = sshll.u32 %s121, 4
          %s129 = int_to_ptr.vmem [resolvable:$true] %s128
          %134 = dma.hbm_to_vmem [thread:$0]  %s127, 1024, %s129, %s118, 128, 128, 8
        $region20: #{tpu_custom_call.1} parent=15 // pred_fallthru
          _
        // Predicated region
        $region21: #{tpu_custom_call.1} parent=15 // pred_check
          %p135 = pneg %p63
        $region22: #{tpu_custom_call.1} parent=15 // pred_check_branch
          %137 = sbr.rel (%p135) target = $region24
        $region23: #{tpu_custom_call.1} parent=15 // pred_region
          %s138 = sand.u32 %s53, 1
          %s139 = scalar_lea.sflag [#allocation6], %s138
          %s140 = sand.u32 %s53, 1
          %s141 = smul.addr %s140, 64
          %s142 = scalar_lea.vmem [#allocation5], %s141
          %s143 = smul.u32 8, %s17
          %s145 = ssub.s32 1024, 1024
          %146 = vsyncadd %s139, %s145
          %s147 = smul.addr %s143, 128
          %s148 = scalar_lea.hbm %s1, %s147
          %s149 = sshll.u32 %s142, 4
          %s150 = int_to_ptr.vmem [resolvable:$true] %s149
          %155 = dma.hbm_to_vmem [thread:$0]  %s148, 1024, %s150, %s139, 128, 128, 8
        $region24: #{tpu_custom_call.1} parent=15 // pred_fallthru
          _
      $region16: #{tpu_custom_call.1} parent=5 // pred_fallthru
        _
      %p156 = scmp.le.s32.totalorder 1, %s17
      %p157 = scmp.lt.s32.totalorder %s17, 17
      %p158 = pnand %p156, %p157
      %p159 = pneg %p158
      // Predicated region
      $region25: #{tpu_custom_call.1} parent=5 // pred_check
        _
      $region26: #{tpu_custom_call.1} parent=5 // pred_check_branch
        %161 = sbr.rel (%p158) target = $region28
      $region27: #{tpu_custom_call.1} parent=5 // pred_region
        %s162 = ssub.s32 %s17, 1
        %s163 = sand.u32 %s30, 1
        %s164 = scalar_lea.sflag [#allocation3], %s163
        %s165 = sand.u32 %s30, 1
        %s166 = smul.addr %s165, 64
        %s167 = scalar_lea.vmem [#allocation2], %s166
        // Predicated region
        $region29: #{tpu_custom_call.1} parent=27 // pred_check
          %p168 = pneg %p43
        $region30: #{tpu_custom_call.1} parent=27 // pred_check_branch
          %170 = sbr.rel (%p168) target = $region32
        $region31: #{tpu_custom_call.1} parent=27 // pred_region
          %171 = dma.done %s164, 1024
        $region32: #{tpu_custom_call.1} parent=27 // pred_fallthru
          _
        %s172 = sand.u32 %s56, 1
        %s173 = scalar_lea.sflag [#allocation6], %s172
        %s174 = sand.u32 %s56, 1
        %s175 = smul.addr %s174, 64
        %s176 = scalar_lea.vmem [#allocation5], %s175
        // Predicated region
        $region33: #{tpu_custom_call.1} parent=27 // pred_check
          %p177 = pneg %p69
        $region34: #{tpu_custom_call.1} parent=27 // pred_check_branch
          %179 = sbr.rel (%p177) target = $region36
        $region35: #{tpu_custom_call.1} parent=27 // pred_region
          %180 = dma.done %s173, 1024
        $region36: #{tpu_custom_call.1} parent=27 // pred_fallthru
          _
        %s181 = sand.u32 %s30, 1
        %s182 = scalar_lea.sflag [#allocation3], %s181
        %s183 = sand.u32 %s30, 1
        %s184 = smul.addr %s183, 64
        %s185 = scalar_lea.vmem [#allocation2], %s184
        %p186 = pneg %p43
        %p187 = pneg %p40
        %s188 = sand.u32 %s56, 1
        %s189 = scalar_lea.sflag [#allocation6], %s188
        %s190 = sand.u32 %s56, 1
        %s191 = smul.addr %s190, 64
        %s192 = scalar_lea.vmem [#allocation5], %s191
        %p193 = pneg %p69
        %p194 = pneg %p66
        %p195 = pneg %p95
        %p196 = pneg %p92
        %s197 = sand.u32 %s82, 1
        %s198 = scalar_lea.sflag [#allocation4], %s197
        %s199 = sand.u32 %s82, 1
        %s200 = smul.addr %s199, 64
        %s201 = scalar_lea.vmem [#allocation7], %s200
        %s202 = smul.u32 8, %s22
        %s203 = smul.u32 8, %s22
        %s204 = smul.u32 8, %s22
        %v205 = vld [vmem:[%s167] sm:$0xff]
        %v206 = vld [vmem:[%s167 + $0x8] sm:$0xff]
        %v207 = vld [vmem:[%s167 + $0x10] sm:$0xff]
        %v208 = vld [vmem:[%s167 + $0x18] sm:$0xff]
        %v209 = vld [vmem:[%s167 + $0x20] sm:$0xff]
        %v210 = vld [vmem:[%s167 + $0x28] sm:$0xff]
        %v211 = vld [vmem:[%s167 + $0x30] sm:$0xff]
        %v212 = vld [vmem:[%s167 + $0x38] sm:$0xff]
        %v213 = vld [vmem:[%s176] sm:$0xff]
        %v214 = vld [vmem:[%s176 + $0x8] sm:$0xff]
        %v215 = vld [vmem:[%s176 + $0x10] sm:$0xff]
        %v216 = vld [vmem:[%s176 + $0x18] sm:$0xff]
        %v217 = vld [vmem:[%s176 + $0x20] sm:$0xff]
        %v218 = vld [vmem:[%s176 + $0x28] sm:$0xff]
        %v219 = vld [vmem:[%s176 + $0x30] sm:$0xff]
        %v220 = vld [vmem:[%s176 + $0x38] sm:$0xff]
        %v221 = vrsqrt.pop %v205
        %v222 = vmul.f32 %v205, %v221
        %vm223 = vcmp.eq.f32.partialorder %v205, inf
        %v224 = vsel %vm223, %v205, %v222
        %vm225 = vcmp.eq.f32.partialorder %v205, 0.0
        %v226 = vand.u32 %v205, 2147483648
        %v227 = vsel %vm225, %v226, %v224
        %v228 = vrsqrt.pop %v206
        %v229 = vmul.f32 %v206, %v228
        %vm230 = vcmp.eq.f32.partialorder %v206, inf
        %v231 = vsel %vm230, %v206, %v229
        %vm232 = vcmp.eq.f32.partialorder %v206, 0.0
        %v233 = vand.u32 %v206, 2147483648
        %v234 = vsel %vm232, %v233, %v231
        %v235 = vrsqrt.pop %v207
        %v236 = vmul.f32 %v207, %v235
        %vm237 = vcmp.eq.f32.partialorder %v207, inf
        %v238 = vsel %vm237, %v207, %v236
        %vm239 = vcmp.eq.f32.partialorder %v207, 0.0
        %v240 = vand.u32 %v207, 2147483648
        %v241 = vsel %vm239, %v240, %v238
        %v242 = vrsqrt.pop %v208
        %v243 = vmul.f32 %v208, %v242
        %vm244 = vcmp.eq.f32.partialorder %v208, inf
        %v245 = vsel %vm244, %v208, %v243
        %vm246 = vcmp.eq.f32.partialorder %v208, 0.0
        %v247 = vand.u32 %v208, 2147483648
        %v248 = vsel %vm246, %v247, %v245
        %v249 = vrsqrt.pop %v209
        %v250 = vmul.f32 %v209, %v249
        %vm251 = vcmp.eq.f32.partialorder %v209, inf
        %v252 = vsel %vm251, %v209, %v250
        %vm253 = vcmp.eq.f32.partialorder %v209, 0.0
        %v254 = vand.u32 %v209, 2147483648
        %v255 = vsel %vm253, %v254, %v252
        %v256 = vrsqrt.pop %v210
        %v257 = vmul.f32 %v210, %v256
        %vm258 = vcmp.eq.f32.partialorder %v210, inf
        %v259 = vsel %vm258, %v210, %v257
        %vm260 = vcmp.eq.f32.partialorder %v210, 0.0
        %v261 = vand.u32 %v210, 2147483648
        %v262 = vsel %vm260, %v261, %v259
        %v263 = vrsqrt.pop %v211
        %v264 = vmul.f32 %v211, %v263
        %vm265 = vcmp.eq.f32.partialorder %v211, inf
        %v266 = vsel %vm265, %v211, %v264
        %vm267 = vcmp.eq.f32.partialorder %v211, 0.0
        %v268 = vand.u32 %v211, 2147483648
        %v269 = vsel %vm267, %v268, %v266
        %v270 = vrsqrt.pop %v212
        %v271 = vmul.f32 %v212, %v270
        %vm272 = vcmp.eq.f32.partialorder %v212, inf
        %v273 = vsel %vm272, %v212, %v271
        %vm274 = vcmp.eq.f32.partialorder %v212, 0.0
        %v275 = vand.u32 %v212, 2147483648
        %v276 = vsel %vm274, %v275, %v273
        %v277 = vmul.f32 %v205, %v227
        %v278 = vmul.f32 %v206, %v234
        %v279 = vmul.f32 %v207, %v241
        %v280 = vmul.f32 %v208, %v248
        %v281 = vmul.f32 %v209, %v255
        %v282 = vmul.f32 %v210, %v262
        %v283 = vmul.f32 %v211, %v269
        %v284 = vmul.f32 %v212, %v276
        %v285 = vmul.f32 %v205, %v205
        %v286 = vmul.f32 %v206, %v206
        %v287 = vmul.f32 %v207, %v207
        %v288 = vmul.f32 %v208, %v208
        %v289 = vmul.f32 %v209, %v209
        %v290 = vmul.f32 %v210, %v210
        %v291 = vmul.f32 %v211, %v211
        %v292 = vmul.f32 %v212, %v212
        %v293 = vmul.f32 %v227, 0.47231582
        %v294 = vmul.f32 %v234, 0.47231582
        %v295 = vmul.f32 %v241, 0.47231582
        %v296 = vmul.f32 %v248, 0.47231582
        %v297 = vmul.f32 %v255, 0.47231582
        %v298 = vmul.f32 %v262, 0.47231582
        %v299 = vmul.f32 %v269, 0.47231582
        %v300 = vmul.f32 %v276, 0.47231582
        %v301 = vmul.f32 %v205, 0.22308414
        %v302 = vmul.f32 %v206, 0.22308414
        %v303 = vmul.f32 %v207, 0.22308414
        %v304 = vmul.f32 %v208, 0.22308414
        %v305 = vmul.f32 %v209, 0.22308414
        %v306 = vmul.f32 %v210, 0.22308414
        %v307 = vmul.f32 %v211, 0.22308414
        %v308 = vmul.f32 %v212, 0.22308414
        %v309 = vadd.f32 %v293, %v301
        %v310 = vadd.f32 %v294, %v302
        %v311 = vadd.f32 %v295, %v303
        %v312 = vadd.f32 %v296, %v304
        %v313 = vadd.f32 %v297, %v305
        %v314 = vadd.f32 %v298, %v306
        %v315 = vadd.f32 %v299, %v307
        %v316 = vadd.f32 %v300, %v308
        %v317 = vmul.f32 %v277, 0.10186655
        %v318 = vmul.f32 %v278, 0.10186655
        %v319 = vmul.f32 %v279, 0.10186655
        %v320 = vmul.f32 %v280, 0.10186655
        %v321 = vmul.f32 %v281, 0.10186655
        %v322 = vmul.f32 %v282, 0.10186655
        %v323 = vmul.f32 %v283, 0.10186655
        %v324 = vmul.f32 %v284, 0.10186655
        %v325 = vadd.f32 %v309, %v317
        %v326 = vadd.f32 %v310, %v318
        %v327 = vadd.f32 %v311, %v319
        %v328 = vadd.f32 %v312, %v320
        %v329 = vadd.f32 %v313, %v321
        %v330 = vadd.f32 %v314, %v322
        %v331 = vadd.f32 %v315, %v323
        %v332 = vadd.f32 %v316, %v324
        %v333 = vmul.f32 %v285, 0.030651996
        %v334 = vmul.f32 %v286, 0.030651996
        %v335 = vmul.f32 %v287, 0.030651996
        %v336 = vmul.f32 %v288, 0.030651996
        %v337 = vmul.f32 %v289, 0.030651996
        %v338 = vmul.f32 %v290, 0.030651996
        %v339 = vmul.f32 %v291, 0.030651996
        %v340 = vmul.f32 %v292, 0.030651996
        %v341 = vadd.f32 %v325, %v333
        %v342 = vadd.f32 %v326, %v334
        %v343 = vadd.f32 %v327, %v335
        %v344 = vadd.f32 %v328, %v336
        %v345 = vadd.f32 %v329, %v337
        %v346 = vadd.f32 %v330, %v338
        %v347 = vadd.f32 %v331, %v339
        %v348 = vadd.f32 %v332, %v340
        %v349 = vrcp.pop %v341
        %v350 = vrcp.pop %v342
        %v351 = vrcp.pop %v343
        %v352 = vrcp.pop %v344
        %v353 = vrcp.pop %v345
        %v354 = vrcp.pop %v346
        %v355 = vrcp.pop %v347
        %v356 = vrcp.pop %v348
        %v357 = vmul.f32 %v205, 0.2137
        %v358 = vmul.f32 %v206, 0.2137
        %v359 = vmul.f32 %v207, 0.2137
        %v360 = vmul.f32 %v208, 0.2137
        %v361 = vmul.f32 %v209, 0.2137
        %v362 = vmul.f32 %v210, 0.2137
        %v363 = vmul.f32 %v211, 0.2137
        %v364 = vmul.f32 %v212, 0.2137
        %v365 = vadd.f32 %v357, 1.0
        %v366 = vadd.f32 %v358, 1.0
        %v367 = vadd.f32 %v359, 1.0
        %v368 = vadd.f32 %v360, 1.0
        %v369 = vadd.f32 %v361, 1.0
        %v370 = vadd.f32 %v362, 1.0
        %v371 = vadd.f32 %v363, 1.0
        %v372 = vadd.f32 %v364, 1.0
        %v373 = vmul.f32 %v365, -0.062182
        %v374 = vmul.f32 %v366, -0.062182
        %v375 = vmul.f32 %v367, -0.062182
        %v376 = vmul.f32 %v368, -0.062182
        %v377 = vmul.f32 %v369, -0.062182
        %v378 = vmul.f32 %v370, -0.062182
        %v379 = vmul.f32 %v371, -0.062182
        %v380 = vmul.f32 %v372, -0.062182
        %v381 = vadd.f32 %v349, 1.0
        %v382 = vlog2.pop %v381
        %v383 = vmul.f32 %v382, 0.6931472
        %v384 = vmul.f32 -0.5, %v349
        %v385 = vadd.f32 %v384, 1.0
        %v386 = vmul.f32 %v385, %v349
        %v387 = vand.u32 2147483647, %v349
        %vm388 = vcmp.lt.f32.partialorder %v387, 0.0004427343
        %v389 = vsel %vm388, %v386, %v383
        %v390 = vadd.f32 %v350, 1.0
        %v391 = vlog2.pop %v390
        %v392 = vmul.f32 %v391, 0.6931472
        %v393 = vmul.f32 -0.5, %v350
        %v394 = vadd.f32 %v393, 1.0
        %v395 = vmul.f32 %v394, %v350
        %v396 = vand.u32 2147483647, %v350
        %vm397 = vcmp.lt.f32.partialorder %v396, 0.0004427343
        %v398 = vsel %vm397, %v395, %v392
        %v399 = vadd.f32 %v351, 1.0
        %v400 = vlog2.pop %v399
        %v401 = vmul.f32 %v400, 0.6931472
        %v402 = vmul.f32 -0.5, %v351
        %v403 = vadd.f32 %v402, 1.0
        %v404 = vmul.f32 %v403, %v351
        %v405 = vand.u32 2147483647, %v351
        %vm406 = vcmp.lt.f32.partialorder %v405, 0.0004427343
        %v407 = vsel %vm406, %v404, %v401
        %v408 = vadd.f32 %v352, 1.0
        %v409 = vlog2.pop %v408
        %v410 = vmul.f32 %v409, 0.6931472
        %v411 = vmul.f32 -0.5, %v352
        %v412 = vadd.f32 %v411, 1.0
        %v413 = vmul.f32 %v412, %v352
        %v414 = vand.u32 2147483647, %v352
        %vm415 = vcmp.lt.f32.partialorder %v414, 0.0004427343
        %v416 = vsel %vm415, %v413, %v410
        %v417 = vadd.f32 %v353, 1.0
        %v418 = vlog2.pop %v417
        %v419 = vmul.f32 %v418, 0.6931472
        %v420 = vmul.f32 -0.5, %v353
        %v421 = vadd.f32 %v420, 1.0
        %v422 = vmul.f32 %v421, %v353
        %v423 = vand.u32 2147483647, %v353
        %vm424 = vcmp.lt.f32.partialorder %v423, 0.0004427343
        %v425 = vsel %vm424, %v422, %v419
        %v426 = vadd.f32 %v354, 1.0
        %v427 = vlog2.pop %v426
        %v428 = vmul.f32 %v427, 0.6931472
        %v429 = vmul.f32 -0.5, %v354
        %v430 = vadd.f32 %v429, 1.0
        %v431 = vmul.f32 %v430, %v354
        %v432 = vand.u32 2147483647, %v354
        %vm433 = vcmp.lt.f32.partialorder %v432, 0.0004427343
        %v434 = vsel %vm433, %v431, %v428
        %v435 = vadd.f32 %v355, 1.0
        %v436 = vlog2.pop %v435
        %v437 = vmul.f32 %v436, 0.6931472
        %v438 = vmul.f32 -0.5, %v355
        %v439 = vadd.f32 %v438, 1.0
        %v440 = vmul.f32 %v439, %v355
        %v441 = vand.u32 2147483647, %v355
        %vm442 = vcmp.lt.f32.partialorder %v441, 0.0004427343
        %v443 = vsel %vm442, %v440, %v437
        %v444 = vadd.f32 %v356, 1.0
        %v445 = vlog2.pop %v444
        %v446 = vmul.f32 %v445, 0.6931472
        %v447 = vmul.f32 -0.5, %v356
        %v448 = vadd.f32 %v447, 1.0
        %v449 = vmul.f32 %v448, %v356
        %v450 = vand.u32 2147483647, %v356
        %vm451 = vcmp.lt.f32.partialorder %v450, 0.0004427343
        %v452 = vsel %vm451, %v449, %v446
        %v453 = vmul.f32 %v373, %v389
        %v454 = vmul.f32 %v374, %v398
        %v455 = vmul.f32 %v375, %v407
        %v456 = vmul.f32 %v376, %v416
        %v457 = vmul.f32 %v377, %v425
        %v458 = vmul.f32 %v378, %v434
        %v459 = vmul.f32 %v379, %v443
        %v460 = vmul.f32 %v380, %v452
        %v461 = vmul.f32 %v227, 0.4389566
        %v462 = vmul.f32 %v234, 0.4389566
        %v463 = vmul.f32 %v241, 0.4389566
        %v464 = vmul.f32 %v248, 0.4389566
        %v465 = vmul.f32 %v255, 0.4389566
        %v466 = vmul.f32 %v262, 0.4389566
        %v467 = vmul.f32 %v269, 0.4389566
        %v468 = vmul.f32 %v276, 0.4389566
        %v469 = vmul.f32 %v205, 0.1926865
        %v470 = vmul.f32 %v206, 0.1926865
        %v471 = vmul.f32 %v207, 0.1926865
        %v472 = vmul.f32 %v208, 0.1926865
        %v473 = vmul.f32 %v209, 0.1926865
        %v474 = vmul.f32 %v210, 0.1926865
        %v475 = vmul.f32 %v211, 0.1926865
        %v476 = vmul.f32 %v212, 0.1926865
        %v477 = vadd.f32 %v461, %v469
        %v478 = vadd.f32 %v462, %v470
        %v479 = vadd.f32 %v463, %v471
        %v480 = vadd.f32 %v464, %v472
        %v481 = vadd.f32 %v465, %v473
        %v482 = vadd.f32 %v466, %v474
        %v483 = vadd.f32 %v467, %v475
        %v484 = vadd.f32 %v468, %v476
        %v485 = vmul.f32 %v277, 0.10465516
        %v486 = vmul.f32 %v278, 0.10465516
        %v487 = vmul.f32 %v279, 0.10465516
        %v488 = vmul.f32 %v280, 0.10465516
        %v489 = vmul.f32 %v281, 0.10465516
        %v490 = vmul.f32 %v282, 0.10465516
        %v491 = vmul.f32 %v283, 0.10465516
        %v492 = vmul.f32 %v284, 0.10465516
        %v493 = vadd.f32 %v477, %v485
        %v494 = vadd.f32 %v478, %v486
        %v495 = vadd.f32 %v479, %v487
        %v496 = vadd.f32 %v480, %v488
        %v497 = vadd.f32 %v481, %v489
        %v498 = vadd.f32 %v482, %v490
        %v499 = vadd.f32 %v483, %v491
        %v500 = vadd.f32 %v484, %v492
        %v501 = vmul.f32 %v285, 0.019436534
        %v502 = vmul.f32 %v286, 0.019436534
        %v503 = vmul.f32 %v287, 0.019436534
        %v504 = vmul.f32 %v288, 0.019436534
        %v505 = vmul.f32 %v289, 0.019436534
        %v506 = vmul.f32 %v290, 0.019436534
        %v507 = vmul.f32 %v291, 0.019436534
        %v508 = vmul.f32 %v292, 0.019436534
        %v509 = vadd.f32 %v493, %v501
        %v510 = vadd.f32 %v494, %v502
        %v511 = vadd.f32 %v495, %v503
        %v512 = vadd.f32 %v496, %v504
        %v513 = vadd.f32 %v497, %v505
        %v514 = vadd.f32 %v498, %v506
        %v515 = vadd.f32 %v499, %v507
        %v516 = vadd.f32 %v500, %v508
        %v517 = vrcp.pop %v509
        %v518 = vrcp.pop %v510
        %v519 = vrcp.pop %v511
        %v520 = vrcp.pop %v512
        %v521 = vrcp.pop %v513
        %v522 = vrcp.pop %v514
        %v523 = vrcp.pop %v515
        %v524 = vrcp.pop %v516
        %v525 = vmul.f32 %v205, 0.20548
        %v526 = vmul.f32 %v206, 0.20548
        %v527 = vmul.f32 %v207, 0.20548
        %v528 = vmul.f32 %v208, 0.20548
        %v529 = vmul.f32 %v209, 0.20548
        %v530 = vmul.f32 %v210, 0.20548
        %v531 = vmul.f32 %v211, 0.20548
        %v532 = vmul.f32 %v212, 0.20548
        %v533 = vadd.f32 %v525, 1.0
        %v534 = vadd.f32 %v526, 1.0
        %v535 = vadd.f32 %v527, 1.0
        %v536 = vadd.f32 %v528, 1.0
        %v537 = vadd.f32 %v529, 1.0
        %v538 = vadd.f32 %v530, 1.0
        %v539 = vadd.f32 %v531, 1.0
        %v540 = vadd.f32 %v532, 1.0
        %v541 = vmul.f32 %v533, -0.03109
        %v542 = vmul.f32 %v534, -0.03109
        %v543 = vmul.f32 %v535, -0.03109
        %v544 = vmul.f32 %v536, -0.03109
        %v545 = vmul.f32 %v537, -0.03109
        %v546 = vmul.f32 %v538, -0.03109
        %v547 = vmul.f32 %v539, -0.03109
        %v548 = vmul.f32 %v540, -0.03109
        %v549 = vadd.f32 %v517, 1.0
        %v550 = vlog2.pop %v549
        %v551 = vmul.f32 %v550, 0.6931472
        %v552 = vmul.f32 -0.5, %v517
        %v553 = vadd.f32 %v552, 1.0
        %v554 = vmul.f32 %v553, %v517
        %v555 = vand.u32 2147483647, %v517
        %vm556 = vcmp.lt.f32.partialorder %v555, 0.0004427343
        %v557 = vsel %vm556, %v554, %v551
        %v558 = vadd.f32 %v518, 1.0
        %v559 = vlog2.pop %v558
        %v560 = vmul.f32 %v559, 0.6931472
        %v561 = vmul.f32 -0.5, %v518
        %v562 = vadd.f32 %v561, 1.0
        %v563 = vmul.f32 %v562, %v518
        %v564 = vand.u32 2147483647, %v518
        %vm565 = vcmp.lt.f32.partialorder %v564, 0.0004427343
        %v566 = vsel %vm565, %v563, %v560
        %v567 = vadd.f32 %v519, 1.0
        %v568 = vlog2.pop %v567
        %v569 = vmul.f32 %v568, 0.6931472
        %v570 = vmul.f32 -0.5, %v519
        %v571 = vadd.f32 %v570, 1.0
        %v572 = vmul.f32 %v571, %v519
        %v573 = vand.u32 2147483647, %v519
        %vm574 = vcmp.lt.f32.partialorder %v573, 0.0004427343
        %v575 = vsel %vm574, %v572, %v569
        %v576 = vadd.f32 %v520, 1.0
        %v577 = vlog2.pop %v576
        %v578 = vmul.f32 %v577, 0.6931472
        %v579 = vmul.f32 -0.5, %v520
        %v580 = vadd.f32 %v579, 1.0
        %v581 = vmul.f32 %v580, %v520
        %v582 = vand.u32 2147483647, %v520
        %vm583 = vcmp.lt.f32.partialorder %v582, 0.0004427343
        %v584 = vsel %vm583, %v581, %v578
        %v585 = vadd.f32 %v521, 1.0
        %v586 = vlog2.pop %v585
        %v587 = vmul.f32 %v586, 0.6931472
        %v588 = vmul.f32 -0.5, %v521
        %v589 = vadd.f32 %v588, 1.0
        %v590 = vmul.f32 %v589, %v521
        %v591 = vand.u32 2147483647, %v521
        %vm592 = vcmp.lt.f32.partialorder %v591, 0.0004427343
        %v593 = vsel %vm592, %v590, %v587
        %v594 = vadd.f32 %v522, 1.0
        %v595 = vlog2.pop %v594
        %v596 = vmul.f32 %v595, 0.6931472
        %v597 = vmul.f32 -0.5, %v522
        %v598 = vadd.f32 %v597, 1.0
        %v599 = vmul.f32 %v598, %v522
        %v600 = vand.u32 2147483647, %v522
        %vm601 = vcmp.lt.f32.partialorder %v600, 0.0004427343
        %v602 = vsel %vm601, %v599, %v596
        %v603 = vadd.f32 %v523, 1.0
        %v604 = vlog2.pop %v603
        %v605 = vmul.f32 %v604, 0.6931472
        %v606 = vmul.f32 -0.5, %v523
        %v607 = vadd.f32 %v606, 1.0
        %v608 = vmul.f32 %v607, %v523
        %v609 = vand.u32 2147483647, %v523
        %vm610 = vcmp.lt.f32.partialorder %v609, 0.0004427343
        %v611 = vsel %vm610, %v608, %v605
        %v612 = vadd.f32 %v524, 1.0
        %v613 = vlog2.pop %v612
        %v614 = vmul.f32 %v613, 0.6931472
        %v615 = vmul.f32 -0.5, %v524
        %v616 = vadd.f32 %v615, 1.0
        %v617 = vmul.f32 %v616, %v524
        %v618 = vand.u32 2147483647, %v524
        %vm619 = vcmp.lt.f32.partialorder %v618, 0.0004427343
        %v620 = vsel %vm619, %v617, %v614
        %v621 = vmul.f32 %v541, %v557
        %v622 = vmul.f32 %v542, %v566
        %v623 = vmul.f32 %v543, %v575
        %v624 = vmul.f32 %v544, %v584
        %v625 = vmul.f32 %v545, %v593
        %v626 = vmul.f32 %v546, %v602
        %v627 = vmul.f32 %v547, %v611
        %v628 = vmul.f32 %v548, %v620
        %v629 = vmul.f32 %v227, 0.3497973
        %v630 = vmul.f32 %v234, 0.3497973
        %v631 = vmul.f32 %v241, 0.3497973
        %v632 = vmul.f32 %v248, 0.3497973
        %v633 = vmul.f32 %v255, 0.3497973
        %v634 = vmul.f32 %v262, 0.3497973
        %v635 = vmul.f32 %v269, 0.3497973
        %v636 = vmul.f32 %v276, 0.3497973
        %v637 = vmul.f32 %v205, 0.12236658
        %v638 = vmul.f32 %v206, 0.12236658
        %v639 = vmul.f32 %v207, 0.12236658
        %v640 = vmul.f32 %v208, 0.12236658
        %v641 = vmul.f32 %v209, 0.12236658
        %v642 = vmul.f32 %v210, 0.12236658
        %v643 = vmul.f32 %v211, 0.12236658
        %v644 = vmul.f32 %v212, 0.12236658
        %v645 = vadd.f32 %v629, %v637
        %v646 = vadd.f32 %v630, %v638
        %v647 = vadd.f32 %v631, %v639
        %v648 = vadd.f32 %v632, %v640
        %v649 = vadd.f32 %v633, %v641
        %v650 = vadd.f32 %v634, %v642
        %v651 = vadd.f32 %v635, %v643
        %v652 = vadd.f32 %v636, %v644
        %v653 = vmul.f32 %v277, 0.0297299
        %v654 = vmul.f32 %v278, 0.0297299
        %v655 = vmul.f32 %v279, 0.0297299
        %v656 = vmul.f32 %v280, 0.0297299
        %v657 = vmul.f32 %v281, 0.0297299
        %v658 = vmul.f32 %v282, 0.0297299
        %v659 = vmul.f32 %v283, 0.0297299
        %v660 = vmul.f32 %v284, 0.0297299
        %v661 = vadd.f32 %v645, %v653
        %v662 = vadd.f32 %v646, %v654
        %v663 = vadd.f32 %v647, %v655
        %v664 = vadd.f32 %v648, %v656
        %v665 = vadd.f32 %v649, %v657
        %v666 = vadd.f32 %v650, %v658
        %v667 = vadd.f32 %v651, %v659
        %v668 = vadd.f32 %v652, %v660
        %v669 = vmul.f32 %v285, 0.016775884
        %v670 = vmul.f32 %v286, 0.016775884
        %v671 = vmul.f32 %v287, 0.016775884
        %v672 = vmul.f32 %v288, 0.016775884
        %v673 = vmul.f32 %v289, 0.016775884
        %v674 = vmul.f32 %v290, 0.016775884
        %v675 = vmul.f32 %v291, 0.016775884
        %v676 = vmul.f32 %v292, 0.016775884
        %v677 = vadd.f32 %v661, %v669
        %v678 = vadd.f32 %v662, %v670
        %v679 = vadd.f32 %v663, %v671
        %v680 = vadd.f32 %v664, %v672
        %v681 = vadd.f32 %v665, %v673
        %v682 = vadd.f32 %v666, %v674
        %v683 = vadd.f32 %v667, %v675
        %v684 = vadd.f32 %v668, %v676
        %v685 = vrcp.pop %v677
        %v686 = vrcp.pop %v678
        %v687 = vrcp.pop %v679
        %v688 = vrcp.pop %v680
        %v689 = vrcp.pop %v681
        %v690 = vrcp.pop %v682
        %v691 = vrcp.pop %v683
        %v692 = vrcp.pop %v684
        %v693 = vmul.f32 %v205, 0.11125
        %v694 = vmul.f32 %v206, 0.11125
        %v695 = vmul.f32 %v207, 0.11125
        %v696 = vmul.f32 %v208, 0.11125
        %v697 = vmul.f32 %v209, 0.11125
        %v698 = vmul.f32 %v210, 0.11125
        %v699 = vmul.f32 %v211, 0.11125
        %v700 = vmul.f32 %v212, 0.11125
        %v701 = vadd.f32 %v693, 1.0
        %v702 = vadd.f32 %v694, 1.0
        %v703 = vadd.f32 %v695, 1.0
        %v704 = vadd.f32 %v696, 1.0
        %v705 = vadd.f32 %v697, 1.0
        %v706 = vadd.f32 %v698, 1.0
        %v707 = vadd.f32 %v699, 1.0
        %v708 = vadd.f32 %v700, 1.0
        %v709 = vmul.f32 %v701, -0.033774
        %v710 = vmul.f32 %v702, -0.033774
        %v711 = vmul.f32 %v703, -0.033774
        %v712 = vmul.f32 %v704, -0.033774
        %v713 = vmul.f32 %v705, -0.033774
        %v714 = vmul.f32 %v706, -0.033774
        %v715 = vmul.f32 %v707, -0.033774
        %v716 = vmul.f32 %v708, -0.033774
        %v717 = vadd.f32 %v685, 1.0
        %v718 = vlog2.pop %v717
        %v719 = vmul.f32 %v718, 0.6931472
        %v720 = vmul.f32 -0.5, %v685
        %v721 = vadd.f32 %v720, 1.0
        %v722 = vmul.f32 %v721, %v685
        %v723 = vand.u32 2147483647, %v685
        %vm724 = vcmp.lt.f32.partialorder %v723, 0.0004427343
        %v725 = vsel %vm724, %v722, %v719
        %v726 = vadd.f32 %v686, 1.0
        %v727 = vlog2.pop %v726
        %v728 = vmul.f32 %v727, 0.6931472
        %v729 = vmul.f32 -0.5, %v686
        %v730 = vadd.f32 %v729, 1.0
        %v731 = vmul.f32 %v730, %v686
        %v732 = vand.u32 2147483647, %v686
        %vm733 = vcmp.lt.f32.partialorder %v732, 0.0004427343
        %v734 = vsel %vm733, %v731, %v728
        %v735 = vadd.f32 %v687, 1.0
        %v736 = vlog2.pop %v735
        %v737 = vmul.f32 %v736, 0.6931472
        %v738 = vmul.f32 -0.5, %v687
        %v739 = vadd.f32 %v738, 1.0
        %v740 = vmul.f32 %v739, %v687
        %v741 = vand.u32 2147483647, %v687
        %vm742 = vcmp.lt.f32.partialorder %v741, 0.0004427343
        %v743 = vsel %vm742, %v740, %v737
        %v744 = vadd.f32 %v688, 1.0
        %v745 = vlog2.pop %v744
        %v746 = vmul.f32 %v745, 0.6931472
        %v747 = vmul.f32 -0.5, %v688
        %v748 = vadd.f32 %v747, 1.0
        %v749 = vmul.f32 %v748, %v688
        %v750 = vand.u32 2147483647, %v688
        %vm751 = vcmp.lt.f32.partialorder %v750, 0.0004427343
        %v752 = vsel %vm751, %v749, %v746
        %v753 = vadd.f32 %v689, 1.0
        %v754 = vlog2.pop %v753
        %v755 = vmul.f32 %v754, 0.6931472
        %v756 = vmul.f32 -0.5, %v689
        %v757 = vadd.f32 %v756, 1.0
        %v758 = vmul.f32 %v757, %v689
        %v759 = vand.u32 2147483647, %v689
        %vm760 = vcmp.lt.f32.partialorder %v759, 0.0004427343
        %v761 = vsel %vm760, %v758, %v755
        %v762 = vadd.f32 %v690, 1.0
        %v763 = vlog2.pop %v762
        %v764 = vmul.f32 %v763, 0.6931472
        %v765 = vmul.f32 -0.5, %v690
        %v766 = vadd.f32 %v765, 1.0
        %v767 = vmul.f32 %v766, %v690
        %v768 = vand.u32 2147483647, %v690
        %vm769 = vcmp.lt.f32.partialorder %v768, 0.0004427343
        %v770 = vsel %vm769, %v767, %v764
        %v771 = vadd.f32 %v691, 1.0
        %v772 = vlog2.pop %v771
        %v773 = vmul.f32 %v772, 0.6931472
        %v774 = vmul.f32 -0.5, %v691
        %v775 = vadd.f32 %v774, 1.0
        %v776 = vmul.f32 %v775, %v691
        %v777 = vand.u32 2147483647, %v691
        %vm778 = vcmp.lt.f32.partialorder %v777, 0.0004427343
        %v779 = vsel %vm778, %v776, %v773
        %v780 = vadd.f32 %v692, 1.0
        %v781 = vlog2.pop %v780
        %v782 = vmul.f32 %v781, 0.6931472
        %v783 = vmul.f32 -0.5, %v692
        %v784 = vadd.f32 %v783, 1.0
        %v785 = vmul.f32 %v784, %v692
        %v786 = vand.u32 2147483647, %v692
        %vm787 = vcmp.lt.f32.partialorder %v786, 0.0004427343
        %v788 = vsel %vm787, %v785, %v782
        %v789 = vmul.f32 %v709, %v725
        %v790 = vmul.f32 %v710, %v734
        %v791 = vmul.f32 %v711, %v743
        %v792 = vmul.f32 %v712, %v752
        %v793 = vmul.f32 %v713, %v761
        %v794 = vmul.f32 %v714, %v770
        %v795 = vmul.f32 %v715, %v779
        %v796 = vmul.f32 %v716, %v788
        %v797 = vadd.f32 %v213, 1.0
        %v798 = vadd.f32 %v214, 1.0
        %v799 = vadd.f32 %v215, 1.0
        %v800 = vadd.f32 %v216, 1.0
        %v801 = vadd.f32 %v217, 1.0
        %v802 = vadd.f32 %v218, 1.0
        %v803 = vadd.f32 %v219, 1.0
        %v804 = vadd.f32 %v220, 1.0
        %v805 = vmax.f32 %v797, 1e-12
        %v806 = vmax.f32 %v798, 1e-12
        %v807 = vmax.f32 %v799, 1e-12
        %v808 = vmax.f32 %v800, 1e-12
        %v809 = vmax.f32 %v801, 1e-12
        %v810 = vmax.f32 %v802, 1e-12
        %v811 = vmax.f32 %v803, 1e-12
        %v812 = vmax.f32 %v804, 1e-12
        %v821 = vcvt.s32.f32 %v805
        %v822 = vcvt.s32.f32 %v806
        %v823 = vcvt.s32.f32 %v807
        %v824 = vcvt.s32.f32 %v808
        %v825 = vcvt.s32.f32 %v809
        %v826 = vcvt.s32.f32 %v810
        %v827 = vcvt.s32.f32 %v811
        %v828 = vcvt.s32.f32 %v812
        %v829 = vmul.f32 %v821, 0.33333334
        %v830 = vmul.f32 %v822, 0.33333334
        %v831 = vmul.f32 %v823, 0.33333334
        %v832 = vmul.f32 %v824, 0.33333334
        %v833 = vmul.f32 %v825, 0.33333334
        %v834 = vmul.f32 %v826, 0.33333334
        %v835 = vmul.f32 %v827, 0.33333334
        %v836 = vmul.f32 %v828, 0.33333334
        %v837 = vsub.f32 1.4204709e+09, %v829
        %v838 = vsub.f32 1.4204709e+09, %v830
        %v839 = vsub.f32 1.4204709e+09, %v831
        %v840 = vsub.f32 1.4204709e+09, %v832
        %v841 = vsub.f32 1.4204709e+09, %v833
        %v842 = vsub.f32 1.4204709e+09, %v834
        %v843 = vsub.f32 1.4204709e+09, %v835
        %v844 = vsub.f32 1.4204709e+09, %v836
        %v845 = vcvt.f32.s32.to.zero.pseudo %v837
        %v846 = vcvt.f32.s32.to.zero.pseudo %v838
        %v847 = vcvt.f32.s32.to.zero.pseudo %v839
        %v848 = vcvt.f32.s32.to.zero.pseudo %v840
        %v849 = vcvt.f32.s32.to.zero.pseudo %v841
        %v850 = vcvt.f32.s32.to.zero.pseudo %v842
        %v851 = vcvt.f32.s32.to.zero.pseudo %v843
        %v852 = vcvt.f32.s32.to.zero.pseudo %v844
        %v861 = vmul.f32 %v845, %v845
        %v862 = vmul.f32 %v846, %v846
        %v863 = vmul.f32 %v847, %v847
        %v864 = vmul.f32 %v848, %v848
        %v865 = vmul.f32 %v849, %v849
        %v866 = vmul.f32 %v850, %v850
        %v867 = vmul.f32 %v851, %v851
        %v868 = vmul.f32 %v852, %v852
        %v869 = vmul.f32 %v861, %v845
        %v870 = vmul.f32 %v862, %v846
        %v871 = vmul.f32 %v863, %v847
        %v872 = vmul.f32 %v864, %v848
        %v873 = vmul.f32 %v865, %v849
        %v874 = vmul.f32 %v866, %v850
        %v875 = vmul.f32 %v867, %v851
        %v876 = vmul.f32 %v868, %v852
        %v877 = vmul.f32 %v805, %v869
        %v878 = vmul.f32 %v806, %v870
        %v879 = vmul.f32 %v807, %v871
        %v880 = vmul.f32 %v808, %v872
        %v881 = vmul.f32 %v809, %v873
        %v882 = vmul.f32 %v810, %v874
        %v883 = vmul.f32 %v811, %v875
        %v884 = vmul.f32 %v812, %v876
        %v885 = vsub.f32 4.0, %v877
        %v886 = vsub.f32 4.0, %v878
        %v887 = vsub.f32 4.0, %v879
        %v888 = vsub.f32 4.0, %v880
        %v889 = vsub.f32 4.0, %v881
        %v890 = vsub.f32 4.0, %v882
        %v891 = vsub.f32 4.0, %v883
        %v892 = vsub.f32 4.0, %v884
        %v893 = vmul.f32 %v845, %v885
        %v894 = vmul.f32 %v846, %v886
        %v895 = vmul.f32 %v847, %v887
        %v896 = vmul.f32 %v848, %v888
        %v897 = vmul.f32 %v849, %v889
        %v898 = vmul.f32 %v850, %v890
        %v899 = vmul.f32 %v851, %v891
        %v900 = vmul.f32 %v852, %v892
        %v901 = vmul.f32 %v893, 0.33333334
        %v902 = vmul.f32 %v894, 0.33333334
        %v903 = vmul.f32 %v895, 0.33333334
        %v904 = vmul.f32 %v896, 0.33333334
        %v905 = vmul.f32 %v897, 0.33333334
        %v906 = vmul.f32 %v898, 0.33333334
        %v907 = vmul.f32 %v899, 0.33333334
        %v908 = vmul.f32 %v900, 0.33333334
        %v909 = vmul.f32 %v901, %v901
        %v910 = vmul.f32 %v902, %v902
        %v911 = vmul.f32 %v903, %v903
        %v912 = vmul.f32 %v904, %v904
        %v913 = vmul.f32 %v905, %v905
        %v914 = vmul.f32 %v906, %v906
        %v915 = vmul.f32 %v907, %v907
        %v916 = vmul.f32 %v908, %v908
        %v917 = vmul.f32 %v909, %v901
        %v918 = vmul.f32 %v910, %v902
        %v919 = vmul.f32 %v911, %v903
        %v920 = vmul.f32 %v912, %v904
        %v921 = vmul.f32 %v913, %v905
        %v922 = vmul.f32 %v914, %v906
        %v923 = vmul.f32 %v915, %v907
        %v924 = vmul.f32 %v916, %v908
        %v925 = vmul.f32 %v805, %v917
        %v926 = vmul.f32 %v806, %v918
        %v927 = vmul.f32 %v807, %v919
        %v928 = vmul.f32 %v808, %v920
        %v929 = vmul.f32 %v809, %v921
        %v930 = vmul.f32 %v810, %v922
        %v931 = vmul.f32 %v811, %v923
        %v932 = vmul.f32 %v812, %v924
        %v933 = vsub.f32 4.0, %v925
        %v934 = vsub.f32 4.0, %v926
        %v935 = vsub.f32 4.0, %v927
        %v936 = vsub.f32 4.0, %v928
        %v937 = vsub.f32 4.0, %v929
        %v938 = vsub.f32 4.0, %v930
        %v939 = vsub.f32 4.0, %v931
        %v940 = vsub.f32 4.0, %v932
        %v941 = vmul.f32 %v901, %v933
        %v942 = vmul.f32 %v902, %v934
        %v943 = vmul.f32 %v903, %v935
        %v944 = vmul.f32 %v904, %v936
        %v945 = vmul.f32 %v905, %v937
        %v946 = vmul.f32 %v906, %v938
        %v947 = vmul.f32 %v907, %v939
        %v948 = vmul.f32 %v908, %v940
        %v949 = vmul.f32 %v941, 0.33333334
        %v950 = vmul.f32 %v942, 0.33333334
        %v951 = vmul.f32 %v943, 0.33333334
        %v952 = vmul.f32 %v944, 0.33333334
        %v953 = vmul.f32 %v945, 0.33333334
        %v954 = vmul.f32 %v946, 0.33333334
        %v955 = vmul.f32 %v947, 0.33333334
        %v956 = vmul.f32 %v948, 0.33333334
        %v957 = vmul.f32 %v949, %v949
        %v958 = vmul.f32 %v950, %v950
        %v959 = vmul.f32 %v951, %v951
        %v960 = vmul.f32 %v952, %v952
        %v961 = vmul.f32 %v953, %v953
        %v962 = vmul.f32 %v954, %v954
        %v963 = vmul.f32 %v955, %v955
        %v964 = vmul.f32 %v956, %v956
        %v965 = vmul.f32 %v957, %v949
        %v966 = vmul.f32 %v958, %v950
        %v967 = vmul.f32 %v959, %v951
        %v968 = vmul.f32 %v960, %v952
        %v969 = vmul.f32 %v961, %v953
        %v970 = vmul.f32 %v962, %v954
        %v971 = vmul.f32 %v963, %v955
        %v972 = vmul.f32 %v964, %v956
        %v973 = vmul.f32 %v805, %v965
        %v974 = vmul.f32 %v806, %v966
        %v975 = vmul.f32 %v807, %v967
        %v976 = vmul.f32 %v808, %v968
        %v977 = vmul.f32 %v809, %v969
        %v978 = vmul.f32 %v810, %v970
        %v979 = vmul.f32 %v811, %v971
        %v980 = vmul.f32 %v812, %v972
        %v981 = vsub.f32 4.0, %v973
        %v982 = vsub.f32 4.0, %v974
        %v983 = vsub.f32 4.0, %v975
        %v984 = vsub.f32 4.0, %v976
        %v985 = vsub.f32 4.0, %v977
        %v986 = vsub.f32 4.0, %v978
        %v987 = vsub.f32 4.0, %v979
        %v988 = vsub.f32 4.0, %v980
        %v989 = vmul.f32 %v949, %v981
        %v990 = vmul.f32 %v950, %v982
        %v991 = vmul.f32 %v951, %v983
        %v992 = vmul.f32 %v952, %v984
        %v993 = vmul.f32 %v953, %v985
        %v994 = vmul.f32 %v954, %v986
        %v995 = vmul.f32 %v955, %v987
        %v996 = vmul.f32 %v956, %v988
        %v997 = vmul.f32 %v989, 0.33333334
        %v998 = vmul.f32 %v990, 0.33333334
        %v999 = vmul.f32 %v991, 0.33333334
        %v1000 = vmul.f32 %v992, 0.33333334
        %v1001 = vmul.f32 %v993, 0.33333334
        %v1002 = vmul.f32 %v994, 0.33333334
        %v1003 = vmul.f32 %v995, 0.33333334
        %v1004 = vmul.f32 %v996, 0.33333334
        %v1005 = vmul.f32 %v997, %v997
        %v1006 = vmul.f32 %v998, %v998
        %v1007 = vmul.f32 %v999, %v999
        %v1008 = vmul.f32 %v1000, %v1000
        %v1009 = vmul.f32 %v1001, %v1001
        %v1010 = vmul.f32 %v1002, %v1002
        %v1011 = vmul.f32 %v1003, %v1003
        %v1012 = vmul.f32 %v1004, %v1004
        %v1013 = vmul.f32 %v1005, %v997
        %v1014 = vmul.f32 %v1006, %v998
        %v1015 = vmul.f32 %v1007, %v999
        %v1016 = vmul.f32 %v1008, %v1000
        %v1017 = vmul.f32 %v1009, %v1001
        %v1018 = vmul.f32 %v1010, %v1002
        %v1019 = vmul.f32 %v1011, %v1003
        %v1020 = vmul.f32 %v1012, %v1004
        %v1021 = vmul.f32 %v805, %v1013
        %v1022 = vmul.f32 %v806, %v1014
        %v1023 = vmul.f32 %v807, %v1015
        %v1024 = vmul.f32 %v808, %v1016
        %v1025 = vmul.f32 %v809, %v1017
        %v1026 = vmul.f32 %v810, %v1018
        %v1027 = vmul.f32 %v811, %v1019
        %v1028 = vmul.f32 %v812, %v1020
        %v1029 = vsub.f32 4.0, %v1021
        %v1030 = vsub.f32 4.0, %v1022
        %v1031 = vsub.f32 4.0, %v1023
        %v1032 = vsub.f32 4.0, %v1024
        %v1033 = vsub.f32 4.0, %v1025
        %v1034 = vsub.f32 4.0, %v1026
        %v1035 = vsub.f32 4.0, %v1027
        %v1036 = vsub.f32 4.0, %v1028
        %v1037 = vmul.f32 %v997, %v1029
        %v1038 = vmul.f32 %v998, %v1030
        %v1039 = vmul.f32 %v999, %v1031
        %v1040 = vmul.f32 %v1000, %v1032
        %v1041 = vmul.f32 %v1001, %v1033
        %v1042 = vmul.f32 %v1002, %v1034
        %v1043 = vmul.f32 %v1003, %v1035
        %v1044 = vmul.f32 %v1004, %v1036
        %v1045 = vmul.f32 %v1037, 0.33333334
        %v1046 = vmul.f32 %v1038, 0.33333334
        %v1047 = vmul.f32 %v1039, 0.33333334
        %v1048 = vmul.f32 %v1040, 0.33333334
        %v1049 = vmul.f32 %v1041, 0.33333334
        %v1050 = vmul.f32 %v1042, 0.33333334
        %v1051 = vmul.f32 %v1043, 0.33333334
        %v1052 = vmul.f32 %v1044, 0.33333334
        %v1053 = vmul.f32 %v797, %v1045
        %v1054 = vmul.f32 %v798, %v1046
        %v1055 = vmul.f32 %v799, %v1047
        %v1056 = vmul.f32 %v800, %v1048
        %v1057 = vmul.f32 %v801, %v1049
        %v1058 = vmul.f32 %v802, %v1050
        %v1059 = vmul.f32 %v803, %v1051
        %v1060 = vmul.f32 %v804, %v1052
        %v1061 = vmul.f32 %v1053, %v1053
        %v1062 = vmul.f32 %v1054, %v1054
        %v1063 = vmul.f32 %v1055, %v1055
        %v1064 = vmul.f32 %v1056, %v1056
        %v1065 = vmul.f32 %v1057, %v1057
        %v1066 = vmul.f32 %v1058, %v1058
        %v1067 = vmul.f32 %v1059, %v1059
        %v1068 = vmul.f32 %v1060, %v1060
        %v1069 = vsub.f32 1.0, %v213
        %v1070 = vsub.f32 1.0, %v214
        %v1071 = vsub.f32 1.0, %v215
        %v1072 = vsub.f32 1.0, %v216
        %v1073 = vsub.f32 1.0, %v217
        %v1074 = vsub.f32 1.0, %v218
        %v1075 = vsub.f32 1.0, %v219
        %v1076 = vsub.f32 1.0, %v220
        %v1077 = vmax.f32 %v1069, 1e-12
        %v1078 = vmax.f32 %v1070, 1e-12
        %v1079 = vmax.f32 %v1071, 1e-12
        %v1080 = vmax.f32 %v1072, 1e-12
        %v1081 = vmax.f32 %v1073, 1e-12
        %v1082 = vmax.f32 %v1074, 1e-12
        %v1083 = vmax.f32 %v1075, 1e-12
        %v1084 = vmax.f32 %v1076, 1e-12
        %v1093 = vcvt.s32.f32 %v1077
        %v1094 = vcvt.s32.f32 %v1078
        %v1095 = vcvt.s32.f32 %v1079
        %v1096 = vcvt.s32.f32 %v1080
        %v1097 = vcvt.s32.f32 %v1081
        %v1098 = vcvt.s32.f32 %v1082
        %v1099 = vcvt.s32.f32 %v1083
        %v1100 = vcvt.s32.f32 %v1084
        %v1101 = vmul.f32 %v1093, 0.33333334
        %v1102 = vmul.f32 %v1094, 0.33333334
        %v1103 = vmul.f32 %v1095, 0.33333334
        %v1104 = vmul.f32 %v1096, 0.33333334
        %v1105 = vmul.f32 %v1097, 0.33333334
        %v1106 = vmul.f32 %v1098, 0.33333334
        %v1107 = vmul.f32 %v1099, 0.33333334
        %v1108 = vmul.f32 %v1100, 0.33333334
        %v1109 = vsub.f32 1.4204709e+09, %v1101
        %v1110 = vsub.f32 1.4204709e+09, %v1102
        %v1111 = vsub.f32 1.4204709e+09, %v1103
        %v1112 = vsub.f32 1.4204709e+09, %v1104
        %v1113 = vsub.f32 1.4204709e+09, %v1105
        %v1114 = vsub.f32 1.4204709e+09, %v1106
        %v1115 = vsub.f32 1.4204709e+09, %v1107
        %v1116 = vsub.f32 1.4204709e+09, %v1108
        %v1117 = vcvt.f32.s32.to.zero.pseudo %v1109
        %v1118 = vcvt.f32.s32.to.zero.pseudo %v1110
        %v1119 = vcvt.f32.s32.to.zero.pseudo %v1111
        %v1120 = vcvt.f32.s32.to.zero.pseudo %v1112
        %v1121 = vcvt.f32.s32.to.zero.pseudo %v1113
        %v1122 = vcvt.f32.s32.to.zero.pseudo %v1114
        %v1123 = vcvt.f32.s32.to.zero.pseudo %v1115
        %v1124 = vcvt.f32.s32.to.zero.pseudo %v1116
        %v1133 = vmul.f32 %v1117, %v1117
        %v1134 = vmul.f32 %v1118, %v1118
        %v1135 = vmul.f32 %v1119, %v1119
        %v1136 = vmul.f32 %v1120, %v1120
        %v1137 = vmul.f32 %v1121, %v1121
        %v1138 = vmul.f32 %v1122, %v1122
        %v1139 = vmul.f32 %v1123, %v1123
        %v1140 = vmul.f32 %v1124, %v1124
        %v1141 = vmul.f32 %v1133, %v1117
        %v1142 = vmul.f32 %v1134, %v1118
        %v1143 = vmul.f32 %v1135, %v1119
        %v1144 = vmul.f32 %v1136, %v1120
        %v1145 = vmul.f32 %v1137, %v1121
        %v1146 = vmul.f32 %v1138, %v1122
        %v1147 = vmul.f32 %v1139, %v1123
        %v1148 = vmul.f32 %v1140, %v1124
        %v1149 = vmul.f32 %v1077, %v1141
        %v1150 = vmul.f32 %v1078, %v1142
        %v1151 = vmul.f32 %v1079, %v1143
        %v1152 = vmul.f32 %v1080, %v1144
        %v1153 = vmul.f32 %v1081, %v1145
        %v1154 = vmul.f32 %v1082, %v1146
        %v1155 = vmul.f32 %v1083, %v1147
        %v1156 = vmul.f32 %v1084, %v1148
        %v1157 = vsub.f32 4.0, %v1149
        %v1158 = vsub.f32 4.0, %v1150
        %v1159 = vsub.f32 4.0, %v1151
        %v1160 = vsub.f32 4.0, %v1152
        %v1161 = vsub.f32 4.0, %v1153
        %v1162 = vsub.f32 4.0, %v1154
        %v1163 = vsub.f32 4.0, %v1155
        %v1164 = vsub.f32 4.0, %v1156
        %v1165 = vmul.f32 %v1117, %v1157
        %v1166 = vmul.f32 %v1118, %v1158
        %v1167 = vmul.f32 %v1119, %v1159
        %v1168 = vmul.f32 %v1120, %v1160
        %v1169 = vmul.f32 %v1121, %v1161
        %v1170 = vmul.f32 %v1122, %v1162
        %v1171 = vmul.f32 %v1123, %v1163
        %v1172 = vmul.f32 %v1124, %v1164
        %v1173 = vmul.f32 %v1165, 0.33333334
        %v1174 = vmul.f32 %v1166, 0.33333334
        %v1175 = vmul.f32 %v1167, 0.33333334
        %v1176 = vmul.f32 %v1168, 0.33333334
        %v1177 = vmul.f32 %v1169, 0.33333334
        %v1178 = vmul.f32 %v1170, 0.33333334
        %v1179 = vmul.f32 %v1171, 0.33333334
        %v1180 = vmul.f32 %v1172, 0.33333334
        %v1181 = vmul.f32 %v1173, %v1173
        %v1182 = vmul.f32 %v1174, %v1174
        %v1183 = vmul.f32 %v1175, %v1175
        %v1184 = vmul.f32 %v1176, %v1176
        %v1185 = vmul.f32 %v1177, %v1177
        %v1186 = vmul.f32 %v1178, %v1178
        %v1187 = vmul.f32 %v1179, %v1179
        %v1188 = vmul.f32 %v1180, %v1180
        %v1189 = vmul.f32 %v1181, %v1173
        %v1190 = vmul.f32 %v1182, %v1174
        %v1191 = vmul.f32 %v1183, %v1175
        %v1192 = vmul.f32 %v1184, %v1176
        %v1193 = vmul.f32 %v1185, %v1177
        %v1194 = vmul.f32 %v1186, %v1178
        %v1195 = vmul.f32 %v1187, %v1179
        %v1196 = vmul.f32 %v1188, %v1180
        %v1197 = vmul.f32 %v1077, %v1189
        %v1198 = vmul.f32 %v1078, %v1190
        %v1199 = vmul.f32 %v1079, %v1191
        %v1200 = vmul.f32 %v1080, %v1192
        %v1201 = vmul.f32 %v1081, %v1193
        %v1202 = vmul.f32 %v1082, %v1194
        %v1203 = vmul.f32 %v1083, %v1195
        %v1204 = vmul.f32 %v1084, %v1196
        %v1205 = vsub.f32 4.0, %v1197
        %v1206 = vsub.f32 4.0, %v1198
        %v1207 = vsub.f32 4.0, %v1199
        %v1208 = vsub.f32 4.0, %v1200
        %v1209 = vsub.f32 4.0, %v1201
        %v1210 = vsub.f32 4.0, %v1202
        %v1211 = vsub.f32 4.0, %v1203
        %v1212 = vsub.f32 4.0, %v1204
        %v1213 = vmul.f32 %v1173, %v1205
        %v1214 = vmul.f32 %v1174, %v1206
        %v1215 = vmul.f32 %v1175, %v1207
        %v1216 = vmul.f32 %v1176, %v1208
        %v1217 = vmul.f32 %v1177, %v1209
        %v1218 = vmul.f32 %v1178, %v1210
        %v1219 = vmul.f32 %v1179, %v1211
        %v1220 = vmul.f32 %v1180, %v1212
        %v1221 = vmul.f32 %v1213, 0.33333334
        %v1222 = vmul.f32 %v1214, 0.33333334
        %v1223 = vmul.f32 %v1215, 0.33333334
        %v1224 = vmul.f32 %v1216, 0.33333334
        %v1225 = vmul.f32 %v1217, 0.33333334
        %v1226 = vmul.f32 %v1218, 0.33333334
        %v1227 = vmul.f32 %v1219, 0.33333334
        %v1228 = vmul.f32 %v1220, 0.33333334
        %v1229 = vmul.f32 %v1221, %v1221
        %v1230 = vmul.f32 %v1222, %v1222
        %v1231 = vmul.f32 %v1223, %v1223
        %v1232 = vmul.f32 %v1224, %v1224
        %v1233 = vmul.f32 %v1225, %v1225
        %v1234 = vmul.f32 %v1226, %v1226
        %v1235 = vmul.f32 %v1227, %v1227
        %v1236 = vmul.f32 %v1228, %v1228
        %v1237 = vmul.f32 %v1229, %v1221
        %v1238 = vmul.f32 %v1230, %v1222
        %v1239 = vmul.f32 %v1231, %v1223
        %v1240 = vmul.f32 %v1232, %v1224
        %v1241 = vmul.f32 %v1233, %v1225
        %v1242 = vmul.f32 %v1234, %v1226
        %v1243 = vmul.f32 %v1235, %v1227
        %v1244 = vmul.f32 %v1236, %v1228
        %v1245 = vmul.f32 %v1077, %v1237
        %v1246 = vmul.f32 %v1078, %v1238
        %v1247 = vmul.f32 %v1079, %v1239
        %v1248 = vmul.f32 %v1080, %v1240
        %v1249 = vmul.f32 %v1081, %v1241
        %v1250 = vmul.f32 %v1082, %v1242
        %v1251 = vmul.f32 %v1083, %v1243
        %v1252 = vmul.f32 %v1084, %v1244
        %v1253 = vsub.f32 4.0, %v1245
        %v1254 = vsub.f32 4.0, %v1246
        %v1255 = vsub.f32 4.0, %v1247
        %v1256 = vsub.f32 4.0, %v1248
        %v1257 = vsub.f32 4.0, %v1249
        %v1258 = vsub.f32 4.0, %v1250
        %v1259 = vsub.f32 4.0, %v1251
        %v1260 = vsub.f32 4.0, %v1252
        %v1261 = vmul.f32 %v1221, %v1253
        %v1262 = vmul.f32 %v1222, %v1254
        %v1263 = vmul.f32 %v1223, %v1255
        %v1264 = vmul.f32 %v1224, %v1256
        %v1265 = vmul.f32 %v1225, %v1257
        %v1266 = vmul.f32 %v1226, %v1258
        %v1267 = vmul.f32 %v1227, %v1259
        %v1268 = vmul.f32 %v1228, %v1260
        %v1269 = vmul.f32 %v1261, 0.33333334
        %v1270 = vmul.f32 %v1262, 0.33333334
        %v1271 = vmul.f32 %v1263, 0.33333334
        %v1272 = vmul.f32 %v1264, 0.33333334
        %v1273 = vmul.f32 %v1265, 0.33333334
        %v1274 = vmul.f32 %v1266, 0.33333334
        %v1275 = vmul.f32 %v1267, 0.33333334
        %v1276 = vmul.f32 %v1268, 0.33333334
        %v1277 = vmul.f32 %v1269, %v1269
        %v1278 = vmul.f32 %v1270, %v1270
        %v1279 = vmul.f32 %v1271, %v1271
        %v1280 = vmul.f32 %v1272, %v1272
        %v1281 = vmul.f32 %v1273, %v1273
        %v1282 = vmul.f32 %v1274, %v1274
        %v1283 = vmul.f32 %v1275, %v1275
        %v1284 = vmul.f32 %v1276, %v1276
        %v1285 = vmul.f32 %v1277, %v1269
        %v1286 = vmul.f32 %v1278, %v1270
        %v1287 = vmul.f32 %v1279, %v1271
        %v1288 = vmul.f32 %v1280, %v1272
        %v1289 = vmul.f32 %v1281, %v1273
        %v1290 = vmul.f32 %v1282, %v1274
        %v1291 = vmul.f32 %v1283, %v1275
        %v1292 = vmul.f32 %v1284, %v1276
        %v1293 = vmul.f32 %v1077, %v1285
        %v1294 = vmul.f32 %v1078, %v1286
        %v1295 = vmul.f32 %v1079, %v1287
        %v1296 = vmul.f32 %v1080, %v1288
        %v1297 = vmul.f32 %v1081, %v1289
        %v1298 = vmul.f32 %v1082, %v1290
        %v1299 = vmul.f32 %v1083, %v1291
        %v1300 = vmul.f32 %v1084, %v1292
        %v1301 = vsub.f32 4.0, %v1293
        %v1302 = vsub.f32 4.0, %v1294
        %v1303 = vsub.f32 4.0, %v1295
        %v1304 = vsub.f32 4.0, %v1296
        %v1305 = vsub.f32 4.0, %v1297
        %v1306 = vsub.f32 4.0, %v1298
        %v1307 = vsub.f32 4.0, %v1299
        %v1308 = vsub.f32 4.0, %v1300
        %v1309 = vmul.f32 %v1269, %v1301
        %v1310 = vmul.f32 %v1270, %v1302
        %v1311 = vmul.f32 %v1271, %v1303
        %v1312 = vmul.f32 %v1272, %v1304
        %v1313 = vmul.f32 %v1273, %v1305
        %v1314 = vmul.f32 %v1274, %v1306
        %v1315 = vmul.f32 %v1275, %v1307
        %v1316 = vmul.f32 %v1276, %v1308
        %v1317 = vmul.f32 %v1309, 0.33333334
        %v1318 = vmul.f32 %v1310, 0.33333334
        %v1319 = vmul.f32 %v1311, 0.33333334
        %v1320 = vmul.f32 %v1312, 0.33333334
        %v1321 = vmul.f32 %v1313, 0.33333334
        %v1322 = vmul.f32 %v1314, 0.33333334
        %v1323 = vmul.f32 %v1315, 0.33333334
        %v1324 = vmul.f32 %v1316, 0.33333334
        %v1325 = vmul.f32 %v1069, %v1317
        %v1326 = vmul.f32 %v1070, %v1318
        %v1327 = vmul.f32 %v1071, %v1319
        %v1328 = vmul.f32 %v1072, %v1320
        %v1329 = vmul.f32 %v1073, %v1321
        %v1330 = vmul.f32 %v1074, %v1322
        %v1331 = vmul.f32 %v1075, %v1323
        %v1332 = vmul.f32 %v1076, %v1324
        %v1333 = vmul.f32 %v1325, %v1325
        %v1334 = vmul.f32 %v1326, %v1326
        %v1335 = vmul.f32 %v1327, %v1327
        %v1336 = vmul.f32 %v1328, %v1328
        %v1337 = vmul.f32 %v1329, %v1329
        %v1338 = vmul.f32 %v1330, %v1330
        %v1339 = vmul.f32 %v1331, %v1331
        %v1340 = vmul.f32 %v1332, %v1332
        %v1341 = vadd.f32 %v1061, %v1333
        %v1342 = vadd.f32 %v1062, %v1334
        %v1343 = vadd.f32 %v1063, %v1335
        %v1344 = vadd.f32 %v1064, %v1336
        %v1345 = vadd.f32 %v1065, %v1337
        %v1346 = vadd.f32 %v1066, %v1338
        %v1347 = vadd.f32 %v1067, %v1339
        %v1348 = vadd.f32 %v1068, %v1340
        %v1349 = vsub.f32 %v1341, 2.0
        %v1350 = vsub.f32 %v1342, 2.0
        %v1351 = vsub.f32 %v1343, 2.0
        %v1352 = vsub.f32 %v1344, 2.0
        %v1353 = vsub.f32 %v1345, 2.0
        %v1354 = vsub.f32 %v1346, 2.0
        %v1355 = vsub.f32 %v1347, 2.0
        %v1356 = vsub.f32 %v1348, 2.0
        %v1357 = vmul.f32 %v1349, 1.923661
        %v1358 = vmul.f32 %v1350, 1.923661
        %v1359 = vmul.f32 %v1351, 1.923661
        %v1360 = vmul.f32 %v1352, 1.923661
        %v1361 = vmul.f32 %v1353, 1.923661
        %v1362 = vmul.f32 %v1354, 1.923661
        %v1363 = vmul.f32 %v1355, 1.923661
        %v1364 = vmul.f32 %v1356, 1.923661
        %v1365 = vmul.f32 %v213, %v213
        %v1366 = vmul.f32 %v214, %v214
        %v1367 = vmul.f32 %v215, %v215
        %v1368 = vmul.f32 %v216, %v216
        %v1369 = vmul.f32 %v217, %v217
        %v1370 = vmul.f32 %v218, %v218
        %v1371 = vmul.f32 %v219, %v219
        %v1372 = vmul.f32 %v220, %v220
        %v1373 = vmul.f32 %v1365, %v1365
        %v1374 = vmul.f32 %v1366, %v1366
        %v1375 = vmul.f32 %v1367, %v1367
        %v1376 = vmul.f32 %v1368, %v1368
        %v1377 = vmul.f32 %v1369, %v1369
        %v1378 = vmul.f32 %v1370, %v1370
        %v1379 = vmul.f32 %v1371, %v1371
        %v1380 = vmul.f32 %v1372, %v1372
        %v1381 = vmul.f32 %v789, 0.58482236
        %v1382 = vmul.f32 %v790, 0.58482236
        %v1383 = vmul.f32 %v791, 0.58482236
        %v1384 = vmul.f32 %v792, 0.58482236
        %v1385 = vmul.f32 %v793, 0.58482236
        %v1386 = vmul.f32 %v794, 0.58482236
        %v1387 = vmul.f32 %v795, 0.58482236
        %v1388 = vmul.f32 %v796, 0.58482236
        %v1389 = vmul.f32 %v1373, %v1357
        %v1390 = vmul.f32 %v1374, %v1358
        %v1391 = vmul.f32 %v1375, %v1359
        %v1392 = vmul.f32 %v1376, %v1360
        %v1393 = vmul.f32 %v1377, %v1361
        %v1394 = vmul.f32 %v1378, %v1362
        %v1395 = vmul.f32 %v1379, %v1363
        %v1396 = vmul.f32 %v1380, %v1364
        %v1397 = vsub.f32 %v621, %v453
        %v1398 = vsub.f32 %v622, %v454
        %v1399 = vsub.f32 %v623, %v455
        %v1400 = vsub.f32 %v624, %v456
        %v1401 = vsub.f32 %v625, %v457
        %v1402 = vsub.f32 %v626, %v458
        %v1403 = vsub.f32 %v627, %v459
        %v1404 = vsub.f32 %v628, %v460
        %v1405 = vadd.f32 %v1397, %v1381
        %v1406 = vadd.f32 %v1398, %v1382
        %v1407 = vadd.f32 %v1399, %v1383
        %v1408 = vadd.f32 %v1400, %v1384
        %v1409 = vadd.f32 %v1401, %v1385
        %v1410 = vadd.f32 %v1402, %v1386
        %v1411 = vadd.f32 %v1403, %v1387
        %v1412 = vadd.f32 %v1404, %v1388
        %v1413 = vmul.f32 %v1389, %v1405
        %v1414 = vmul.f32 %v1390, %v1406
        %v1415 = vmul.f32 %v1391, %v1407
        %v1416 = vmul.f32 %v1392, %v1408
        %v1417 = vmul.f32 %v1393, %v1409
        %v1418 = vmul.f32 %v1394, %v1410
        %v1419 = vmul.f32 %v1395, %v1411
        %v1420 = vmul.f32 %v1396, %v1412
        %v1421 = vadd.f32 %v453, %v1413
        %v1422 = vadd.f32 %v454, %v1414
        %v1423 = vadd.f32 %v455, %v1415
        %v1424 = vadd.f32 %v456, %v1416
        %v1425 = vadd.f32 %v457, %v1417
        %v1426 = vadd.f32 %v458, %v1418
        %v1427 = vadd.f32 %v459, %v1419
        %v1428 = vadd.f32 %v460, %v1420
        %v1429 = vmul.f32 %v1357, %v1381
        %v1430 = vmul.f32 %v1358, %v1382
        %v1431 = vmul.f32 %v1359, %v1383
        %v1432 = vmul.f32 %v1360, %v1384
        %v1433 = vmul.f32 %v1361, %v1385
        %v1434 = vmul.f32 %v1362, %v1386
        %v1435 = vmul.f32 %v1363, %v1387
        %v1436 = vmul.f32 %v1364, %v1388
        %v1437 = vsub.f32 %v1421, %v1429
        %v1438 = vsub.f32 %v1422, %v1430
        %v1439 = vsub.f32 %v1423, %v1431
        %v1440 = vsub.f32 %v1424, %v1432
        %v1441 = vsub.f32 %v1425, %v1433
        %v1442 = vsub.f32 %v1426, %v1434
        %v1443 = vsub.f32 %v1427, %v1435
        %v1444 = vsub.f32 %v1428, %v1436
        %1445 = vst [vmem:[%s201] sm:$0xff] %v1437
        %1446 = vst [vmem:[%s201 + $0x8] sm:$0xff] %v1438
        %1447 = vst [vmem:[%s201 + $0x10] sm:$0xff] %v1439
        %1448 = vst [vmem:[%s201 + $0x18] sm:$0xff] %v1440
        %1449 = vst [vmem:[%s201 + $0x20] sm:$0xff] %v1441
        %1450 = vst [vmem:[%s201 + $0x28] sm:$0xff] %v1442
        %1451 = vst [vmem:[%s201 + $0x30] sm:$0xff] %v1443
        %1452 = vst [vmem:[%s201 + $0x38] sm:$0xff] %v1444
        %s1453 = sand.u32 %s82, 1
        %s1454 = scalar_lea.sflag [#allocation4], %s1453
        %s1455 = sand.u32 %s82, 1
        %s1456 = smul.addr %s1455, 64
        %s1457 = scalar_lea.vmem [#allocation7], %s1456
        // Predicated region
        $region37: #{tpu_custom_call.1} parent=27 // pred_check
          %p1458 = pneg %p92
        $region38: #{tpu_custom_call.1} parent=27 // pred_check_branch
          %1460 = sbr.rel (%p1458) target = $region40
        $region39: #{tpu_custom_call.1} parent=27 // pred_region
          %s1461 = smul.u32 8, %s22
          %s1463 = ssub.s32 1024, 1024
          %1464 = vsyncadd %s1454, %s1463
          %s1465 = smul.addr %s1461, 128
          %s1466 = scalar_lea.hbm %s2, %s1465
          %s1467 = sshll.u32 %s1457, 4
          %s1468 = int_to_ptr.vmem [resolvable:$true] %s1467
          %1473 = dma.vmem_to_hbm [thread:$0]  %s1468, 1024, %s1466, %s1454, 128, 128, 8
        $region40: #{tpu_custom_call.1} parent=27 // pred_fallthru
          _
      $region28: #{tpu_custom_call.1} parent=5 // pred_fallthru
        _
      %p1474 = scmp.le.s32.totalorder 2, %s17
      // Predicated region
      $region41: #{tpu_custom_call.1} parent=5 // pred_check
        %p1475 = pneg %p1474
      $region42: #{tpu_custom_call.1} parent=5 // pred_check_branch
        %1477 = sbr.rel (%p1475) target = $region44
      $region43: #{tpu_custom_call.1} parent=5 // pred_region
        %s1478 = ssub.s32 %s17, 2
        // Predicated region
        $region45: #{tpu_custom_call.1} parent=43 // pred_check
          %p1479 = pneg %p98
        $region46: #{tpu_custom_call.1} parent=43 // pred_check_branch
          %1481 = sbr.rel (%p1479) target = $region48
        $region47: #{tpu_custom_call.1} parent=43 // pred_region
          %s1482 = sand.u32 %s83, 1
          %s1483 = scalar_lea.sflag [#allocation4], %s1482
          %s1484 = sand.u32 %s83, 1
          %s1485 = smul.addr %s1484, 64
          %s1486 = scalar_lea.vmem [#allocation7], %s1485
          %1487 = dma.done %s1483, 1024
        $region48: #{tpu_custom_call.1} parent=43 // pred_fallthru
          _
      $region44: #{tpu_custom_call.1} parent=5 // pred_fallthru
        _
    $region6: #{tpu_custom_call.1} parent=1 // loop_footer
      %s21 = sadd.s32 1, %s17
    $region7: #{tpu_custom_call.1} parent=1 // loop_footer_branch
      %16 = sbr.rel target = $region3
    $region8: #{tpu_custom_call.1} parent=1 // loop_exit
      _
    %1488 = vsyncpa [#allocation3], 1
    %s1489 = scalar_lea.sflag [#allocation3], 1
    %1490 = vsyncpa %s1489, 1
    %1491 = vsyncpa [#allocation6], 1
    %s1492 = scalar_lea.sflag [#allocation6], 1
    %1493 = vsyncpa %s1492, 1
    %1494 = vsyncpa [#allocation4], 1
    %s1495 = scalar_lea.sflag [#allocation4], 1
    %1496 = vsyncpa %s1495, 1

</llo_original>
